<compile_context>
chip_gen: v7x
topology: tpu7x:2x2x1
jax: 0.10.0
libtpu: 0.0.40
codegen_flags: <defaults>
</compile_context>

<pallas_src>
import jax
import jax.numpy as jnp
from jax.experimental import pallas as pl
from jax.experimental.pallas import tpu as pltpu

LANE = 128
SUBLANE = 8


# ----------------------------- Pallas kernel -------------------------------

def critic_v2_kernel(x_ref,                      # (tile_rows, pack*obs_dim) f32
                     w1_ref, b1_ref,             # (pack*obs_dim, Hp) bf16 / (1, Hp) f32
                     w2_ref, b2_ref,             # (Hp, Hp)           bf16 / (1, Hp) f32
                     w3_ref, b3_ref,             # (Hp, H2p)          bf16 / (1, H2p) f32
                     w4_ref,                     # (H2p, pack)        bf16 (block-diag)
                     b4_ref,                     # (1,)                f32 in SMEM
                     o_ref):                     # (tile_rows, pack)   f32
    # bf16 operands into the MXU, f32 accumulation; bias/ReLU stay f32 so the
    # kernel also runs on v5e (no bf16 VPU).  Off-block weight entries are exact
    # zeros, so packing 4 batch rows per 128-lane vector is numerically identical
    # to the per-row matmuls.
    x = x_ref[...].astype(jnp.bfloat16)

    h = jnp.dot(x, w1_ref[...], preferred_element_type=jnp.float32) + b1_ref[...]
    h = jnp.maximum(h, 0.0)

    h = jnp.dot(h.astype(jnp.bfloat16), w2_ref[...],
                preferred_element_type=jnp.float32) + b2_ref[...]
    h = jnp.maximum(h, 0.0)

    h = jnp.dot(h.astype(jnp.bfloat16), w3_ref[...],
                preferred_element_type=jnp.float32) + b3_ref[...]
    h = jnp.maximum(h, 0.0)

    # Final layer: block-diag W4 gives one V(s) per packed slot -> (tile_rows, pack).
    v = jnp.dot(h.astype(jnp.bfloat16), w4_ref[...],
                preferred_element_type=jnp.float32) + b4_ref[0]

    # logits.view(B, -1) keeps shape; mask is None here; AdaptiveAvgPool1d over
    # an axis of length last_size is the identity.
    o_ref[...] = v.astype(o_ref.dtype)


# ------------------------- One-time weight prep ------------------------------

def _round_up(x, m):
    return ((x + m - 1) // m) * m


def _block_diag_pad(w, pack, rows, cols, dtype):
    """Place `pack` copies of w on the diagonal of a zero (rows, cols) matrix."""
    r, c = w.shape
    out = jnp.zeros((rows, cols), jnp.float32)
    for i in range(pack):
        out = out.at[i * r:(i + 1) * r, i * c:(i + 1) * c].set(w)
    return out.astype(dtype)


def _tile_bias_pad(b, pack, cols, dtype):
    t = jnp.concatenate([b] * pack, axis=1)
    return jnp.pad(t, ((0, 0), (0, cols - t.shape[1]))).astype(dtype)


def prepare_params(params):
    """One-time parameter prep (hoisted out of the per-call path).

    Packs `pack` batch rows per 128-lane vector using block-diagonal weights so
    that no MXU lane is wasted on zero padding, and casts matmul operands to bf16.
    """
    w1, b1 = params["w1"], params["b1"]
    w2, b2 = params["w2"], params["b2"]
    w3, b3 = params["w3"], params["b3"]
    w4, b4 = params["w4"], params["b4"]
    obs_dim, hidden = w1.shape
    h2 = w3.shape[1]
    last = w4.shape[1]
    assert last == 1, "CriticV2 default: single scalar V(s) per row"

    # Largest power-of-two packing that keeps each packed group within 128 lanes.
    pack = 1
    while 2 * pack * max(hidden, h2) <= LANE and 2 * pack * last <= LANE:
        pack *= 2

    hp = _round_up(pack * hidden, LANE)     # = 128 for hidden=32, pack=4 (no waste)
    h2p = _round_up(pack * h2, LANE)

    bf16, f32 = jnp.bfloat16, jnp.float32
    return dict(
        w1=_block_diag_pad(w1, pack, pack * obs_dim, hp, bf16),   # (pack*obs_dim, hp)
        b1=_tile_bias_pad(b1, pack, hp, f32),                     # (1, hp)
        w2=_block_diag_pad(w2, pack, hp, hp, bf16),               # (hp, hp)
        b2=_tile_bias_pad(b2, pack, hp, f32),                     # (1, hp)
        w3=_block_diag_pad(w3, pack, hp, h2p, bf16),              # (hp, h2p)
        b3=_tile_bias_pad(b3, pack, h2p, f32),                    # (1, h2p)
        w4=_block_diag_pad(w4, pack, h2p, pack * last, bf16),     # (h2p, pack*last)
        b4=b4.reshape(-1)[:1].astype(f32),                        # (1,) scalar -> SMEM
    )


# ------------------------------ Wrapper -------------------------------------

def critic_v2_forward(obs, prepped, *, max_tile_rows=2048, balance_two_cores=True):
    """obs: (B, obs_dim) float32; prepped: output of prepare_params.

    Returns (B, last_size) float32.
    """
    B, obs_dim = obs.shape
    kin = prepped["w1"].shape[0]
    pack = kin // obs_dim
    assert pack * obs_dim == kin, "prepared params do not match obs feature dim"
    out_cols = prepped["w4"].shape[1]          # pack * last_size
    last_size = out_cols // pack

    # Pack `pack` consecutive batch rows per vector row: contiguous reshape (free).
    # A few zero rows are appended only if B is not a multiple of `pack`
    # (not hit in the demo, so no obs copy on the hot path).
    rem = (-B) % pack
    if rem:
        obs = jnp.pad(obs, ((0, rem), (0, 0)))
    R = (B + rem) // pack
    xp = obs.reshape(R, kin)

    # Tile selection in packed-row units.  Prefer an even number of grid steps so
    # v7x's two TensorCores are balanced; guarantee no input block is fully OOB.
    max_tile = max(SUBLANE, (max_tile_rows // SUBLANE) * SUBLANE)
    n_steps = pl.cdiv(R, max_tile)
    if balance_two_cores and n_steps % 2 == 1 and R > SUBLANE:
        n_steps += 1
    tile_rows = _round_up(pl.cdiv(R, n_steps), SUBLANE)
    n_steps = pl.cdiv(R, tile_rows)

    def resident(a):  # weights/biases: same block every step -> stay in VMEM
        return pl.BlockSpec(a.shape, lambda i: (0, 0))

    out = pl.pallas_call(
        critic_v2_kernel,
        out_shape=jax.ShapeDtypeStruct((n_steps * tile_rows, out_cols), jnp.float32),
        grid=(n_steps,),
        in_specs=[
            pl.BlockSpec((tile_rows, kin), lambda i: (i, 0)),     # packed obs tile
            resident(prepped["w1"]), resident(prepped["b1"]),
            resident(prepped["w2"]), resident(prepped["b2"]),
            resident(prepped["w3"]), resident(prepped["b3"]),
            resident(prepped["w4"]),
            pl.BlockSpec(memory_space=pltpu.MemorySpace.SMEM),    # b4 scalar
        ],
        out_specs=pl.BlockSpec((tile_rows, out_cols), lambda i: (i, 0)),
        compiler_params=pltpu.CompilerParams(
            dimension_semantics=("parallel",)),                   # shard batch on v7x TCs
    )(xp, prepped["w1"], prepped["b1"], prepped["w2"], prepped["b2"],
      prepped["w3"], prepped["b3"], prepped["w4"], prepped["b4"])

    # (n_steps*tile_rows, pack*last) -> (B, last): rows >= R and batch rows >= B
    # are don't-care boundary padding and are sliced off.
    return out[:R].reshape(R * pack, last_size)[:B]


# ------------------------- Deterministic init -------------------------------

def init_params(key, obs_dim, hidden, h2, last_size):
    ks = jax.random.split(key, 8)

    def lin(kw, kb, fan_in, fan_out):
        w = jax.random.normal(kw, (fan_in, fan_out), jnp.float32) / jnp.sqrt(fan_in)
        b = 0.01 * jax.random.normal(kb, (1, fan_out), jnp.float32)
        return w, b

    w1, b1 = lin(ks[0], ks[1], obs_dim, hidden)   # preprocess layer 1
    w2, b2 = lin(ks[2], ks[3], hidden, hidden)    # preprocess layer 2
    w3, b3 = lin(ks[4], ks[5], hidden, h2)        # last-MLP hidden
    w4, b4 = lin(ks[6], ks[7], h2, last_size)     # last-MLP output
    return dict(w1=w1, b1=b1, w2=w2, b2=b2, w3=w3, b3=b3, w4=w4, b4=b4)


# --------------------------------- Main --------------------------------------

if __name__ == "__main__":
    # Small per-row shapes consistent with the module; B chosen so that the packed
    # grid has 2 balanced steps with a partial boundary tile (2500 rows -> 625
    # packed rows -> 2 tiles of 320).
    B, OBS_DIM, HIDDEN, H2, LAST_SIZE = 2500, 16, 32, 32, 1

    key = jax.random.PRNGKey(0)
    k_obs, k_par = jax.random.split(key)
    obs = jax.random.normal(k_obs, (B, OBS_DIM), jnp.float32)
    params = init_params(k_par, OBS_DIM, HIDDEN, H2, LAST_SIZE)

    prepped = prepare_params(params)            # one-time, hoisted off the hot path
    forward = jax.jit(critic_v2_forward)        # hot path: reshape + pallas_call + slice

    out = jax.block_until_ready(forward(obs, prepped))
    assert out.shape == (B, LAST_SIZE), out.shape

    # Reference 1: full-f32 module semantics (loose tol: kernel uses bf16 MXU operands).
    def ref_f32(x, p):
        h = jnp.maximum(x @ p["w1"] + p["b1"], 0.0)
        h = jnp.maximum(h @ p["w2"] + p["b2"], 0.0)
        h = jnp.maximum(h @ p["w3"] + p["b3"], 0.0)
        return h @ p["w4"] + p["b4"]   # avg-pool over length==last_size axis = identity

    # Reference 2: same mixed precision as the kernel (tight tol).
    def ref_bf16(x, p):
        dot = lambda a, w: jnp.dot(a.astype(jnp.bfloat16), w.astype(jnp.bfloat16),
                                   preferred_element_type=jnp.float32)
        h = jnp.maximum(dot(x, p["w1"]) + p["b1"], 0.0)
        h = jnp.maximum(dot(h, p["w2"]) + p["b2"], 0.0)
        h = jnp.maximum(dot(h, p["w3"]) + p["b3"], 0.0)
        return dot(h, p["w4"]) + p["b4"]

    r32 = ref_f32(obs, params)
    rbf = ref_bf16(obs, params)
    assert jnp.allclose(out, rbf, atol=5e-3, rtol=5e-3), float(jnp.max(jnp.abs(out - rbf)))
    assert jnp.allclose(out, r32, atol=5e-2, rtol=5e-2), float(jnp.max(jnp.abs(out - r32)))

    # TODO(synk): `apply_mask` path (obs.mask) is not exercised — synthetic obs
    # is a plain array with no mask attribute, matching the mask=None branch.
    print("KERNEL_OK")
</pallas_src>

<mosaic_0001>
module attributes {stable_mosaic.version = 11 : i64} {
  func.func @critic_v2_kernel(%arg0: i32, %arg1: memref<320x64xf32, #tpu.memory_space<vmem>>, %arg2: memref<64x128xbf16, #tpu.memory_space<vmem>>, %arg3: memref<1x128xf32, #tpu.memory_space<vmem>>, %arg4: memref<128x128xbf16, #tpu.memory_space<vmem>>, %arg5: memref<1x128xf32, #tpu.memory_space<vmem>>, %arg6: memref<128x128xbf16, #tpu.memory_space<vmem>>, %arg7: memref<1x128xf32, #tpu.memory_space<vmem>>, %arg8: memref<128x4xbf16, #tpu.memory_space<vmem>>, %arg9: memref<1xf32, #tpu.memory_space<smem>>, %arg10: memref<320x4xf32, #tpu.memory_space<vmem>>) attributes {dimension_semantics = [#tpu.dimension_semantics<parallel>], iteration_bounds = array<i64: 2>, scalar_prefetch = 0 : i64, scratch_operands = 0 : i64, tpu.core_type = #tpu.core_type<tc>, window_params = [{transform_indices = @transform_0, window_bounds = array<i64: 320, 64>}, {pipeline_mode = #tpu.pipeline_mode<synchronous>, transform_indices = @transform_1, window_bounds = array<i64: 64, 128>}, {pipeline_mode = #tpu.pipeline_mode<synchronous>, transform_indices = @transform_2, window_bounds = array<i64: 1, 128>}, {pipeline_mode = #tpu.pipeline_mode<synchronous>, transform_indices = @transform_3, window_bounds = array<i64: 128, 128>}, {pipeline_mode = #tpu.pipeline_mode<synchronous>, transform_indices = @transform_4, window_bounds = array<i64: 1, 128>}, {pipeline_mode = #tpu.pipeline_mode<synchronous>, transform_indices = @transform_5, window_bounds = array<i64: 128, 128>}, {pipeline_mode = #tpu.pipeline_mode<synchronous>, transform_indices = @transform_6, window_bounds = array<i64: 1, 128>}, {pipeline_mode = #tpu.pipeline_mode<synchronous>, transform_indices = @transform_7, window_bounds = array<i64: 128, 4>}, {transform_indices = @transform_8, window_bounds = array<i64: 1>}, {transform_indices = @transform_9, window_bounds = array<i64: 320, 4>}]} {
    %c0 = arith.constant 0 : index
    %c0_0 = arith.constant 0 : index
    %0 = vector.load %arg1[%c0, %c0_0] : memref<320x64xf32, #tpu.memory_space<vmem>>, vector<320x64xf32>
    %1 = arith.truncf %0 : vector<320x64xf32> to vector<320x64xbf16>
    %c0_1 = arith.constant 0 : index
    %c0_2 = arith.constant 0 : index
    %2 = vector.load %arg2[%c0_1, %c0_2] : memref<64x128xbf16, #tpu.memory_space<vmem>>, vector<64x128xbf16>
    %cst = arith.constant dense<0.000000e+00> : vector<320x128xf32>
    %3 = tpu.matmul %1, %2, %cst {dimension_numbers = #tpu.dot_dimension_numbers<[1], [0], [0], [1], [0, 0, 1, 1], [], []>} : vector<320x64xbf16>, vector<64x128xbf16>, vector<320x128xf32> -> vector<320x128xf32>
    %c0_3 = arith.constant 0 : index
    %c0_4 = arith.constant 0 : index
    %4 = vector.load %arg3[%c0_3, %c0_4] : memref<1x128xf32, #tpu.memory_space<vmem>>, vector<1x128xf32>
    %5 = vector.broadcast %4 : vector<1x128xf32> to vector<320x128xf32>
    %6 = arith.addf %3, %5 : vector<320x128xf32>
    %cst_5 = arith.constant 0.000000e+00 : f32
    %7 = vector.broadcast %cst_5 : f32 to vector<320x128xf32>
    %8 = arith.maximumf %6, %7 : vector<320x128xf32>
    %9 = arith.truncf %8 : vector<320x128xf32> to vector<320x128xbf16>
    %c0_6 = arith.constant 0 : index
    %c0_7 = arith.constant 0 : index
    %10 = vector.load %arg4[%c0_6, %c0_7] : memref<128x128xbf16, #tpu.memory_space<vmem>>, vector<128x128xbf16>
    %cst_8 = arith.constant dense<0.000000e+00> : vector<320x128xf32>
    %11 = tpu.matmul %9, %10, %cst_8 {dimension_numbers = #tpu.dot_dimension_numbers<[1], [0], [0], [1], [0, 0, 1, 1], [], []>} : vector<320x128xbf16>, vector<128x128xbf16>, vector<320x128xf32> -> vector<320x128xf32>
    %c0_9 = arith.constant 0 : index
    %c0_10 = arith.constant 0 : index
    %12 = vector.load %arg5[%c0_9, %c0_10] : memref<1x128xf32, #tpu.memory_space<vmem>>, vector<1x128xf32>
    %13 = vector.broadcast %12 : vector<1x128xf32> to vector<320x128xf32>
    %14 = arith.addf %11, %13 : vector<320x128xf32>
    %cst_11 = arith.constant 0.000000e+00 : f32
    %15 = vector.broadcast %cst_11 : f32 to vector<320x128xf32>
    %16 = arith.maximumf %14, %15 : vector<320x128xf32>
    %17 = arith.truncf %16 : vector<320x128xf32> to vector<320x128xbf16>
    %c0_12 = arith.constant 0 : index
    %c0_13 = arith.constant 0 : index
    %18 = vector.load %arg6[%c0_12, %c0_13] : memref<128x128xbf16, #tpu.memory_space<vmem>>, vector<128x128xbf16>
    %cst_14 = arith.constant dense<0.000000e+00> : vector<320x128xf32>
    %19 = tpu.matmul %17, %18, %cst_14 {dimension_numbers = #tpu.dot_dimension_numbers<[1], [0], [0], [1], [0, 0, 1, 1], [], []>} : vector<320x128xbf16>, vector<128x128xbf16>, vector<320x128xf32> -> vector<320x128xf32>
    %c0_15 = arith.constant 0 : index
    %c0_16 = arith.constant 0 : index
    %20 = vector.load %arg7[%c0_15, %c0_16] : memref<1x128xf32, #tpu.memory_space<vmem>>, vector<1x128xf32>
    %21 = vector.broadcast %20 : vector<1x128xf32> to vector<320x128xf32>
    %22 = arith.addf %19, %21 : vector<320x128xf32>
    %cst_17 = arith.constant 0.000000e+00 : f32
    %23 = vector.broadcast %cst_17 : f32 to vector<320x128xf32>
    %24 = arith.maximumf %22, %23 : vector<320x128xf32>
    %25 = arith.truncf %24 : vector<320x128xf32> to vector<320x128xbf16>
    %c0_18 = arith.constant 0 : index
    %c0_19 = arith.constant 0 : index
    %26 = vector.load %arg8[%c0_18, %c0_19] : memref<128x4xbf16, #tpu.memory_space<vmem>>, vector<128x4xbf16>
    %cst_20 = arith.constant dense<0.000000e+00> : vector<320x4xf32>
    %27 = tpu.matmul %25, %26, %cst_20 {dimension_numbers = #tpu.dot_dimension_numbers<[1], [0], [0], [1], [0, 0, 1, 1], [], []>} : vector<320x128xbf16>, vector<128x4xbf16>, vector<320x4xf32> -> vector<320x4xf32>
    %c0_21 = arith.constant 0 : index
    %28 = memref.load %arg9[%c0_21] : memref<1xf32, #tpu.memory_space<smem>>
    %29 = vector.broadcast %28 : f32 to vector<320x4xf32>
    %30 = arith.addf %27, %29 : vector<320x4xf32>
    %c0_22 = arith.constant 0 : index
    %c0_23 = arith.constant 0 : index
    %31 = vector.load %arg10[%c0_22, %c0_23] : memref<320x4xf32, #tpu.memory_space<vmem>>, vector<320x4xf32>
    tpu.vector_store %arg10[%c0_22, %c0_23], %30 {strides = array<i32>} : memref<320x4xf32, #tpu.memory_space<vmem>>, vector<320x4xf32>,
    return
  }
  func.func @transform_0(%arg0: i32) -> (i32, i32) {
    %c0_i32 = arith.constant 0 : i32
    %c0_i32_0 = arith.constant 0 : i32
    return %arg0, %c0_i32 : i32, i32
  }
  func.func @transform_1(%arg0: i32) -> (i32, i32) {
    %c0_i32 = arith.constant 0 : i32
    %c0_i32_0 = arith.constant 0 : i32
    %c0_i32_1 = arith.constant 0 : i32
    return %c0_i32, %c0_i32_0 : i32, i32
  }
  func.func @transform_2(%arg0: i32) -> (i32, i32) {
    %c0_i32 = arith.constant 0 : i32
    %c0_i32_0 = arith.constant 0 : i32
    %c0_i32_1 = arith.constant 0 : i32
    return %c0_i32, %c0_i32_0 : i32, i32
  }
  func.func @transform_3(%arg0: i32) -> (i32, i32) {
    %c0_i32 = arith.constant 0 : i32
    %c0_i32_0 = arith.constant 0 : i32
    %c0_i32_1 = arith.constant 0 : i32
    return %c0_i32, %c0_i32_0 : i32, i32
  }
  func.func @transform_4(%arg0: i32) -> (i32, i32) {
    %c0_i32 = arith.constant 0 : i32
    %c0_i32_0 = arith.constant 0 : i32
    %c0_i32_1 = arith.constant 0 : i32
    return %c0_i32, %c0_i32_0 : i32, i32
  }
  func.func @transform_5(%arg0: i32) -> (i32, i32) {
    %c0_i32 = arith.constant 0 : i32
    %c0_i32_0 = arith.constant 0 : i32
    %c0_i32_1 = arith.constant 0 : i32
    return %c0_i32, %c0_i32_0 : i32, i32
  }
  func.func @transform_6(%arg0: i32) -> (i32, i32) {
    %c0_i32 = arith.constant 0 : i32
    %c0_i32_0 = arith.constant 0 : i32
    %c0_i32_1 = arith.constant 0 : i32
    return %c0_i32, %c0_i32_0 : i32, i32
  }
  func.func @transform_7(%arg0: i32) -> (i32, i32) {
    %c0_i32 = arith.constant 0 : i32
    %c0_i32_0 = arith.constant 0 : i32
    %c0_i32_1 = arith.constant 0 : i32
    return %c0_i32, %c0_i32_0 : i32, i32
  }
  func.func @transform_8(%arg0: i32) -> i32 {
    %c0_i32 = arith.constant 0 : i32
    %c0_i32_0 = arith.constant 0 : i32
    return %c0_i32 : i32
  }
  func.func @transform_9(%arg0: i32) -> (i32, i32) {
    %c0_i32 = arith.constant 0 : i32
    %c0_i32_0 = arith.constant 0 : i32
    return %arg0, %c0_i32 : i32, i32
  }
}

</mosaic_0001>

<llo_original>
// kernel: critic_v2_forward.1
$region0: #{critic_v2_forward.1}
  #allocation0 [shape = 'u32[]', space=smem, size = 0x4, offset = 0x4, fixed_abs, tag = 'smem constant byte address 0x4 - core index']
  #allocation1 [shape = 'u32[144,128]{1,0:T(1,128)}', space=vmem, size = 0x12000, scoped, tag = 'internal scratch']
  #allocation2 [shape = 'f32[1]{0:T(128)S(6)}', space=smem, size = 0x200, scoped, tag = 'scoped memory for critic_v2_forward.1']
  %s0 = inlined_call_operand.vmem [shape: f32[625,64], index: 0, kind: input, shape index: {}]
  %s1 = inlined_call_operand.vmem [shape: bf16[64,128], index: 1, kind: input, shape index: {}]
  %s2 = inlined_call_operand.vmem [shape: f32[1,128], index: 2, kind: input, shape index: {}]
  %s3 = inlined_call_operand.vmem [shape: bf16[128,128], index: 3, kind: input, shape index: {}]
  %s4 = inlined_call_operand.vmem [shape: f32[1,128], index: 4, kind: input, shape index: {}]
  %s5 = inlined_call_operand.vmem [shape: bf16[128,128], index: 5, kind: input, shape index: {}]
  %s6 = inlined_call_operand.vmem [shape: f32[1,128], index: 6, kind: input, shape index: {}]
  %s7 = inlined_call_operand.vmem [shape: bf16[128,4], index: 7, kind: input, shape index: {}]
  %s8 = inlined_call_operand.<no memory space> [shape: f32[1], index: 8, kind: input, shape index: {}]
  %s9 = inlined_call_operand.vmem [shape: f32[640,4], index: 9, kind: output, shape index: {}]
  %s10 = sld [smem:[#allocation0]]
  $region69: #{critic_v2_forward.1} parent=0
    _
  %s12 = ssub.s32 1, %s10
  %s13 = scalar_select 0, %s12, %s10
  %14 = sst [smem:[#allocation2]] %s8
  loop: start=0, step=1, limit=4
  $region2: #{critic_v2_forward.1} parent=0 // loop_pre_header
    _
  $region3: #{critic_v2_forward.1} parent=0 // loop_header
    %s16 = sphi 0, %s20
    %p17 = scmp.ge.s32.totalorder %s16, 4
    %s26 = sphi 0, %s28
    %s29 = sphi 0, %s26
    %s30 = sphi 0, %s29
    %s46 = sphi 0, %s30
    %s50 = sphi 0, %s50
    %s52 = sphi 0, %s50
    %s53 = sphi 0, %s52
    %s67 = sphi 0, %s53
    %s71 = sphi 0, %s71
    %s73 = sphi 0, %s71
    %s74 = sphi 0, %s73
    %s88 = sphi 0, %s74
    %s92 = sphi 0, %s92
    %s94 = sphi 0, %s92
    %s95 = sphi 0, %s94
    %s109 = sphi 0, %s95
    %s113 = sphi 0, %s113
    %s115 = sphi 0, %s113
    %s116 = sphi 0, %s115
    %s130 = sphi 0, %s116
    %s134 = sphi 0, %s134
    %s136 = sphi 0, %s134
    %s137 = sphi 0, %s136
    %s151 = sphi 0, %s137
    %s155 = sphi 0, %s155
    %s157 = sphi 0, %s155
    %s158 = sphi 0, %s157
    %s172 = sphi 0, %s158
    %s176 = sphi 0, %s176
    %s178 = sphi 0, %s176
    %s179 = sphi 0, %s178
    %s193 = sphi 0, %s179
    %s197 = sphi 0, %s197
    %s199 = sphi 0, %s197
    %s200 = sphi 0, %s199
    %s214 = sphi 0, %s200
    %s220 = sphi 0, %s222
    %s223 = sphi 0, %s220
    %s224 = sphi 0, %s223
    %s240 = sphi 0, %s224
  $region4: #{critic_v2_forward.1} parent=0 // loop_header_branch
    %19 = sbr.rel (%p17) target = $region8
  $region5: #{critic_v2_forward.1} parent=0 // loop_body
    %s21 = ssub.s32 %s16, 1
    %s22 = ssub.s32 %s16, 2
    %s23 = sadd.s32 %s16, 1
    %s24 = ssub.s32 %s16, %s23
    %p25 = scmp.eq.s32.totalorder %s24, 0
    %s27 = sadd.s32 %s26, 1
    %s28 = scalar_select %p25, %s26, %s27
    %p31 = pneg %p25
    %p32 = scmp.eq.s32.totalorder %s16, 1
    %p33 = por %p31, %p32
    %p34 = scmp.ne.s32.totalorder %s26, %s29
    %p35 = scmp.eq.s32.totalorder %s16, 0
    %p36 = por %p34, %p35
    %p37 = scmp.ne.s32.totalorder %s26, %s29
    %p38 = scmp.eq.s32.totalorder %s21, 1
    %p39 = por %p37, %p38
    %p40 = scmp.ne.s32.totalorder %s29, %s30
    %p41 = scmp.eq.s32.totalorder %s21, 0
    %p42 = por %p40, %p41
    %p43 = scmp.ne.s32.totalorder %s29, %s30
    %p44 = scmp.eq.s32.totalorder %s22, 1
    %p45 = por %p43, %p44
    %p47 = scmp.ne.s32.totalorder %s30, %s46
    %p48 = scmp.eq.s32.totalorder %s22, 0
    %p49 = por %p47, %p48
    %s51 = sadd.s32 %s50, 1
    %p54 = scmp.eq.s32.totalorder %s16, 1
    %p55 = scmp.ne.s32.totalorder %s50, %s52
    %p56 = scmp.eq.s32.totalorder %s16, 0
    %p57 = por %p55, %p56
    %p58 = scmp.ne.s32.totalorder %s50, %s52
    %p59 = scmp.eq.s32.totalorder %s21, 1
    %p60 = por %p58, %p59
    %p61 = scmp.ne.s32.totalorder %s52, %s53
    %p62 = scmp.eq.s32.totalorder %s21, 0
    %p63 = por %p61, %p62
    %p64 = scmp.ne.s32.totalorder %s52, %s53
    %p65 = scmp.eq.s32.totalorder %s22, 1
    %p66 = por %p64, %p65
    %p68 = scmp.ne.s32.totalorder %s53, %s67
    %p69 = scmp.eq.s32.totalorder %s22, 0
    %p70 = por %p68, %p69
    %s72 = sadd.s32 %s71, 1
    %p75 = scmp.eq.s32.totalorder %s16, 1
    %p76 = scmp.ne.s32.totalorder %s71, %s73
    %p77 = scmp.eq.s32.totalorder %s16, 0
    %p78 = por %p76, %p77
    %p79 = scmp.ne.s32.totalorder %s71, %s73
    %p80 = scmp.eq.s32.totalorder %s21, 1
    %p81 = por %p79, %p80
    %p82 = scmp.ne.s32.totalorder %s73, %s74
    %p83 = scmp.eq.s32.totalorder %s21, 0
    %p84 = por %p82, %p83
    %p85 = scmp.ne.s32.totalorder %s73, %s74
    %p86 = scmp.eq.s32.totalorder %s22, 1
    %p87 = por %p85, %p86
    %p89 = scmp.ne.s32.totalorder %s74, %s88
    %p90 = scmp.eq.s32.totalorder %s22, 0
    %p91 = por %p89, %p90
    %s93 = sadd.s32 %s92, 1
    %p96 = scmp.eq.s32.totalorder %s16, 1
    %p97 = scmp.ne.s32.totalorder %s92, %s94
    %p98 = scmp.eq.s32.totalorder %s16, 0
    %p99 = por %p97, %p98
    %p100 = scmp.ne.s32.totalorder %s92, %s94
    %p101 = scmp.eq.s32.totalorder %s21, 1
    %p102 = por %p100, %p101
    %p103 = scmp.ne.s32.totalorder %s94, %s95
    %p104 = scmp.eq.s32.totalorder %s21, 0
    %p105 = por %p103, %p104
    %p106 = scmp.ne.s32.totalorder %s94, %s95
    %p107 = scmp.eq.s32.totalorder %s22, 1
    %p108 = por %p106, %p107
    %p110 = scmp.ne.s32.totalorder %s95, %s109
    %p111 = scmp.eq.s32.totalorder %s22, 0
    %p112 = por %p110, %p111
    %s114 = sadd.s32 %s113, 1
    %p117 = scmp.eq.s32.totalorder %s16, 1
    %p118 = scmp.ne.s32.totalorder %s113, %s115
    %p119 = scmp.eq.s32.totalorder %s16, 0
    %p120 = por %p118, %p119
    %p121 = scmp.ne.s32.totalorder %s113, %s115
    %p122 = scmp.eq.s32.totalorder %s21, 1
    %p123 = por %p121, %p122
    %p124 = scmp.ne.s32.totalorder %s115, %s116
    %p125 = scmp.eq.s32.totalorder %s21, 0
    %p126 = por %p124, %p125
    %p127 = scmp.ne.s32.totalorder %s115, %s116
    %p128 = scmp.eq.s32.totalorder %s22, 1
    %p129 = por %p127, %p128
    %p131 = scmp.ne.s32.totalorder %s116, %s130
    %p132 = scmp.eq.s32.totalorder %s22, 0
    %p133 = por %p131, %p132
    %s135 = sadd.s32 %s134, 1
    %p138 = scmp.eq.s32.totalorder %s16, 1
    %p139 = scmp.ne.s32.totalorder %s134, %s136
    %p140 = scmp.eq.s32.totalorder %s16, 0
    %p141 = por %p139, %p140
    %p142 = scmp.ne.s32.totalorder %s134, %s136
    %p143 = scmp.eq.s32.totalorder %s21, 1
    %p144 = por %p142, %p143
    %p145 = scmp.ne.s32.totalorder %s136, %s137
    %p146 = scmp.eq.s32.totalorder %s21, 0
    %p147 = por %p145, %p146
    %p148 = scmp.ne.s32.totalorder %s136, %s137
    %p149 = scmp.eq.s32.totalorder %s22, 1
    %p150 = por %p148, %p149
    %p152 = scmp.ne.s32.totalorder %s137, %s151
    %p153 = scmp.eq.s32.totalorder %s22, 0
    %p154 = por %p152, %p153
    %s156 = sadd.s32 %s155, 1
    %p159 = scmp.eq.s32.totalorder %s16, 1
    %p160 = scmp.ne.s32.totalorder %s155, %s157
    %p161 = scmp.eq.s32.totalorder %s16, 0
    %p162 = por %p160, %p161
    %p163 = scmp.ne.s32.totalorder %s155, %s157
    %p164 = scmp.eq.s32.totalorder %s21, 1
    %p165 = por %p163, %p164
    %p166 = scmp.ne.s32.totalorder %s157, %s158
    %p167 = scmp.eq.s32.totalorder %s21, 0
    %p168 = por %p166, %p167
    %p169 = scmp.ne.s32.totalorder %s157, %s158
    %p170 = scmp.eq.s32.totalorder %s22, 1
    %p171 = por %p169, %p170
    %p173 = scmp.ne.s32.totalorder %s158, %s172
    %p174 = scmp.eq.s32.totalorder %s22, 0
    %p175 = por %p173, %p174
    %s177 = sadd.s32 %s176, 1
    %p180 = scmp.eq.s32.totalorder %s16, 1
    %p181 = scmp.ne.s32.totalorder %s176, %s178
    %p182 = scmp.eq.s32.totalorder %s16, 0
    %p183 = por %p181, %p182
    %p184 = scmp.ne.s32.totalorder %s176, %s178
    %p185 = scmp.eq.s32.totalorder %s21, 1
    %p186 = por %p184, %p185
    %p187 = scmp.ne.s32.totalorder %s178, %s179
    %p188 = scmp.eq.s32.totalorder %s21, 0
    %p189 = por %p187, %p188
    %p190 = scmp.ne.s32.totalorder %s178, %s179
    %p191 = scmp.eq.s32.totalorder %s22, 1
    %p192 = por %p190, %p191
    %p194 = scmp.ne.s32.totalorder %s179, %s193
    %p195 = scmp.eq.s32.totalorder %s22, 0
    %p196 = por %p194, %p195
    %s198 = sadd.s32 %s197, 1
    %p201 = scmp.eq.s32.totalorder %s16, 1
    %p202 = scmp.ne.s32.totalorder %s197, %s199
    %p203 = scmp.eq.s32.totalorder %s16, 0
    %p204 = por %p202, %p203
    %p205 = scmp.ne.s32.totalorder %s197, %s199
    %p206 = scmp.eq.s32.totalorder %s21, 1
    %p207 = por %p205, %p206
    %p208 = scmp.ne.s32.totalorder %s199, %s200
    %p209 = scmp.eq.s32.totalorder %s21, 0
    %p210 = por %p208, %p209
    %p211 = scmp.ne.s32.totalorder %s199, %s200
    %p212 = scmp.eq.s32.totalorder %s22, 1
    %p213 = por %p211, %p212
    %p215 = scmp.ne.s32.totalorder %s200, %s214
    %p216 = scmp.eq.s32.totalorder %s22, 0
    %p217 = por %p215, %p216
    %s218 = ssub.s32 %s16, %s23
    %p219 = scmp.eq.s32.totalorder %s218, 0
    %s221 = sadd.s32 %s220, 1
    %s222 = scalar_select %p219, %s220, %s221
    %p225 = pneg %p219
    %p226 = scmp.eq.s32.totalorder %s16, 1
    %p227 = por %p225, %p226
    %p228 = scmp.ne.s32.totalorder %s220, %s223
    %p229 = scmp.eq.s32.totalorder %s16, 0
    %p230 = por %p228, %p229
    %p231 = scmp.ne.s32.totalorder %s220, %s223
    %p232 = scmp.eq.s32.totalorder %s21, 1
    %p233 = por %p231, %p232
    %p234 = scmp.ne.s32.totalorder %s223, %s224
    %p235 = scmp.eq.s32.totalorder %s21, 0
    %p236 = por %p234, %p235
    %p237 = scmp.ne.s32.totalorder %s223, %s224
    %p238 = scmp.eq.s32.totalorder %s22, 1
    %p239 = por %p237, %p238
    %p241 = scmp.ne.s32.totalorder %s224, %s240
    %p242 = scmp.eq.s32.totalorder %s22, 0
    %p243 = por %p241, %p242
    %p244 = scmp.le.s32.totalorder 1, %s16
    %p245 = scmp.lt.s32.totalorder %s16, 3
    %p246 = pnand %p244, %p245
    %p247 = pneg %p246
    // Predicated region
    $region9: #{critic_v2_forward.1} parent=5 // pred_check
      _
    $region10: #{critic_v2_forward.1} parent=5 // pred_check_branch
      %249 = sbr.rel (%p246) target = $region12
    $region11: #{critic_v2_forward.1} parent=5 // pred_region
      %s250 = ssub.s32 %s16, 1
      // Predicated region
      $region13: #{critic_v2_forward.1} parent=11 // pred_check
        %p251 = pneg %p63
      $region14: #{critic_v2_forward.1} parent=11 // pred_check_branch
        %253 = sbr.rel (%p251) target = $region16
      $region15: #{critic_v2_forward.1} parent=11 // pred_region
        _
      $region16: #{critic_v2_forward.1} parent=11 // pred_fallthru
        _
      // Predicated region
      $region17: #{critic_v2_forward.1} parent=11 // pred_check
        %p254 = pneg %p84
      $region18: #{critic_v2_forward.1} parent=11 // pred_check_branch
        %256 = sbr.rel (%p254) target = $region20
      $region19: #{critic_v2_forward.1} parent=11 // pred_region
        _
      $region20: #{critic_v2_forward.1} parent=11 // pred_fallthru
        _
      // Predicated region
      $region21: #{critic_v2_forward.1} parent=11 // pred_check
        %p257 = pneg %p105
      $region22: #{critic_v2_forward.1} parent=11 // pred_check_branch
        %259 = sbr.rel (%p257) target = $region24
      $region23: #{critic_v2_forward.1} parent=11 // pred_region
        _
      $region24: #{critic_v2_forward.1} parent=11 // pred_fallthru
        _
      // Predicated region
      $region25: #{critic_v2_forward.1} parent=11 // pred_check
        %p260 = pneg %p126
      $region26: #{critic_v2_forward.1} parent=11 // pred_check_branch
        %262 = sbr.rel (%p260) target = $region28
      $region27: #{critic_v2_forward.1} parent=11 // pred_region
        _
      $region28: #{critic_v2_forward.1} parent=11 // pred_fallthru
        _
      // Predicated region
      $region29: #{critic_v2_forward.1} parent=11 // pred_check
        %p263 = pneg %p147
      $region30: #{critic_v2_forward.1} parent=11 // pred_check_branch
        %265 = sbr.rel (%p263) target = $region32
      $region31: #{critic_v2_forward.1} parent=11 // pred_region
        _
      $region32: #{critic_v2_forward.1} parent=11 // pred_fallthru
        _
      // Predicated region
      $region33: #{critic_v2_forward.1} parent=11 // pred_check
        %p266 = pneg %p168
      $region34: #{critic_v2_forward.1} parent=11 // pred_check_branch
        %268 = sbr.rel (%p266) target = $region36
      $region35: #{critic_v2_forward.1} parent=11 // pred_region
        _
      $region36: #{critic_v2_forward.1} parent=11 // pred_fallthru
        _
      // Predicated region
      $region37: #{critic_v2_forward.1} parent=11 // pred_check
        %p269 = pneg %p189
      $region38: #{critic_v2_forward.1} parent=11 // pred_check_branch
        %271 = sbr.rel (%p269) target = $region40
      $region39: #{critic_v2_forward.1} parent=11 // pred_region
        _
      $region40: #{critic_v2_forward.1} parent=11 // pred_fallthru
        _
      // Predicated region
      $region41: #{critic_v2_forward.1} parent=11 // pred_check
        %p272 = pneg %p210
      $region42: #{critic_v2_forward.1} parent=11 // pred_check_branch
        %274 = sbr.rel (%p272) target = $region44
      $region43: #{critic_v2_forward.1} parent=11 // pred_region
        _
      $region44: #{critic_v2_forward.1} parent=11 // pred_fallthru
        _
    $region12: #{critic_v2_forward.1} parent=5 // pred_fallthru
      _
    %p275 = scmp.lt.s32.totalorder %s16, 2
    // Predicated region
    $region45: #{critic_v2_forward.1} parent=5 // pred_check
      %p276 = pneg %p275
    $region46: #{critic_v2_forward.1} parent=5 // pred_check_branch
      %278 = sbr.rel (%p276) target = $region48
    $region47: #{critic_v2_forward.1} parent=5 // pred_region
      // Predicated region
      $region49: #{critic_v2_forward.1} parent=47 // pred_check
        %p279 = pneg %p36
      $region50: #{critic_v2_forward.1} parent=47 // pred_check_branch
        %281 = sbr.rel (%p279) target = $region52
      $region51: #{critic_v2_forward.1} parent=47 // pred_region
        %s282 = smul.u32 40, %s16
        %s283 = ssub.s32 79, %s282
        %p284 = scmp.lt.s32.totalorder %s283, 40
        %s285 = scalar_select %p284, %s283, 40
        %s286 = smul.u32 128, %s285
        %p287 = scmp.lt.s32.totalorder %s282, 78
        %s288 = scalar_select %p287, %s282, 78
        %s289 = smul.addr %s288, 8
        %s290 = scalar_lea.vmem %s0, %s289
        %s291 = smul.u32 40, %s16
        %s292 = ssub.s32 79, %s291
        %p293 = scmp.lt.s32.totalorder %s292, 40
        %s294 = scalar_select %p293, %s292, 40
        %s295 = smul.u32 128, %s294
      $region52: #{critic_v2_forward.1} parent=47 // pred_fallthru
        _
    $region48: #{critic_v2_forward.1} parent=5 // pred_fallthru
      _
    %p296 = scmp.le.s32.totalorder 1, %s16
    %p297 = scmp.lt.s32.totalorder %s16, 3
    %p298 = pnand %p296, %p297
    %p299 = pneg %p298
    // Predicated region
    $region53: #{critic_v2_forward.1} parent=5 // pred_check
      _
    $region54: #{critic_v2_forward.1} parent=5 // pred_check_branch
      %301 = sbr.rel (%p298) target = $region56
    $region55: #{critic_v2_forward.1} parent=5 // pred_region
      %s302 = ssub.s32 %s16, 1
      %s303 = smul.u32 40, %s21
      %s304 = ssub.s32 79, %s303
      %p305 = scmp.lt.s32.totalorder %s304, 40
      %s306 = scalar_select %p305, %s304, 40
      %s307 = smul.u32 128, %s306
      %p308 = scmp.lt.s32.totalorder %s303, 78
      %s309 = scalar_select %p308, %s303, 78
      %s310 = smul.addr %s309, 8
      %s311 = scalar_lea.vmem %s0, %s310
      %p312 = pneg %p42
      %p313 = pneg %p39
      %p314 = pneg %p63
      %p315 = pneg %p60
      %p316 = pneg %p84
      %p317 = pneg %p81
      %p318 = pneg %p105
      %p319 = pneg %p102
      %p320 = pneg %p126
      %p321 = pneg %p123
      %p322 = pneg %p147
      %p323 = pneg %p144
      %p324 = pneg %p168
      %p325 = pneg %p165
      %p326 = pneg %p189
      %p327 = pneg %p186
      %p328 = pneg %p210
      %p329 = pneg %p207
      %p330 = pneg %p236
      %p331 = pneg %p233
      %s332 = smul.u32 40, %s21
      %p333 = scmp.lt.s32.totalorder %s332, 79
      %s334 = scalar_select %p333, %s332, 79
      %s335 = smul.addr %s334, 8
      %s336 = scalar_lea.vmem %s9, %s335
      %s337 = smul.u32 40, %s21
      %s338 = ssub.s32 79, %s337
      %p339 = scmp.lt.s32.totalorder %s338, 40
      %s340 = scalar_select %p339, %s338, 40
      %s341 = smul.u32 128, %s340
      %p342 = scmp.lt.s32.totalorder %s337, 78
      %s343 = scalar_select %p342, %s337, 78
      %s344 = smul.addr %s343, 8
      %s345 = scalar_lea.vmem %s0, %s344
      %s346 = smul.u32 40, %s21
      %s347 = ssub.s32 79, %s346
      %p348 = scmp.lt.s32.totalorder %s347, 40
      %s349 = scalar_select %p348, %s347, 40
      %s350 = smul.u32 128, %s349
      %s351 = smul.u32 40, %s21
      %p352 = scmp.lt.s32.totalorder %s351, 79
      %s353 = scalar_select %p352, %s351, 79
      %s354 = smul.addr %s353, 8
      %s355 = scalar_lea.vmem %s9, %s354
      %s356 = smul.u32 40, %s21
      %v358 = vld [vmem:[%s345] sm:$0xff]
      %v359 = vld [vmem:[%s345 + $0x8] sm:$0xff]
      %v360 = vld [vmem:[%s345 + $0x10] sm:$0xff]
      %v361 = vld [vmem:[%s345 + $0x18] sm:$0xff]
      %v362 = vld [vmem:[%s345 + $0x20] sm:$0xff]
      %v363 = vld [vmem:[%s345 + $0x28] sm:$0xff]
      %v364 = vld [vmem:[%s345 + $0x30] sm:$0xff]
      %v365 = vld [vmem:[%s345 + $0x38] sm:$0xff]
      %v366 = vld [vmem:[%s345 + $0x40] sm:$0xff]
      %v367 = vld [vmem:[%s345 + $0x48] sm:$0xff]
      %v368 = vld [vmem:[%s345 + $0x50] sm:$0xff]
      %v369 = vld [vmem:[%s345 + $0x58] sm:$0xff]
      %v370 = vld [vmem:[%s345 + $0x60] sm:$0xff]
      %v371 = vld [vmem:[%s345 + $0x68] sm:$0xff]
      %v372 = vld [vmem:[%s345 + $0x70] sm:$0xff]
      %v373 = vld [vmem:[%s345 + $0x78] sm:$0xff]
      %v374 = vld [vmem:[%s345 + $0x80] sm:$0xff]
      %v375 = vld [vmem:[%s345 + $0x88] sm:$0xff]
      %v376 = vld [vmem:[%s345 + $0x90] sm:$0xff]
      %v377 = vld [vmem:[%s345 + $0x98] sm:$0xff]
      %v378 = vld [vmem:[%s345 + $0xa0] sm:$0xff]
      %v379 = vld [vmem:[%s345 + $0xa8] sm:$0xff]
      %v380 = vld [vmem:[%s345 + $0xb0] sm:$0xff]
      %v381 = vld [vmem:[%s345 + $0xb8] sm:$0xff]
      %v382 = vld [vmem:[%s345 + $0xc0] sm:$0xff]
      %v383 = vld [vmem:[%s345 + $0xc8] sm:$0xff]
      %v384 = vld [vmem:[%s345 + $0xd0] sm:$0xff]
      %v385 = vld [vmem:[%s345 + $0xd8] sm:$0xff]
      %v386 = vld [vmem:[%s345 + $0xe0] sm:$0xff]
      %v387 = vld [vmem:[%s345 + $0xe8] sm:$0xff]
      %v388 = vld [vmem:[%s345 + $0xf0] sm:$0xff]
      %v389 = vld [vmem:[%s345 + $0xf8] sm:$0xff]
      %v390 = vld [vmem:[%s345 + $0x100] sm:$0xff]
      %v391 = vld [vmem:[%s345 + $0x108] sm:$0xff]
      %v392 = vld [vmem:[%s345 + $0x110] sm:$0xff]
      %v393 = vld [vmem:[%s345 + $0x118] sm:$0xff]
      %v394 = vld [vmem:[%s345 + $0x120] sm:$0xff]
      %v395 = vld [vmem:[%s345 + $0x128] sm:$0xff]
      %v396 = vld [vmem:[%s345 + $0x130] sm:$0xff]
      %v397 = vld [vmem:[%s345 + $0x138] sm:$0xff]
      %v398 = vpack.c.bf16 %v359, %v358
      %v399 = vpack.c.bf16 %v361, %v360
      %v400 = vpack.c.bf16 %v363, %v362
      %v401 = vpack.c.bf16 %v365, %v364
      %v402 = vpack.c.bf16 %v367, %v366
      %v403 = vpack.c.bf16 %v369, %v368
      %v404 = vpack.c.bf16 %v371, %v370
      %v405 = vpack.c.bf16 %v373, %v372
      %v406 = vpack.c.bf16 %v375, %v374
      %v407 = vpack.c.bf16 %v377, %v376
      %v408 = vpack.c.bf16 %v379, %v378
      %v409 = vpack.c.bf16 %v381, %v380
      %v410 = vpack.c.bf16 %v383, %v382
      %v411 = vpack.c.bf16 %v385, %v384
      %v412 = vpack.c.bf16 %v387, %v386
      %v413 = vpack.c.bf16 %v389, %v388
      %v414 = vpack.c.bf16 %v391, %v390
      %v415 = vpack.c.bf16 %v393, %v392
      %v416 = vpack.c.bf16 %v395, %v394
      %v417 = vpack.c.bf16 %v397, %v396
      %v418 = vld [vmem:[%s1] sm:$0xf]
      %v419 = vld [vmem:[%s1 + $0x4] sm:$0xf]
      %v420 = vld [vmem:[%s1 + $0x8] sm:$0xf]
      %v421 = vld [vmem:[%s1 + $0xc] sm:$0xf]
      %v422 = vld [vmem:[%s1 + $0x10] sm:$0xf]
      %v423 = vld [vmem:[%s1 + $0x14] sm:$0xf]
      %v424 = vld [vmem:[%s1 + $0x18] sm:$0xf]
      %v425 = vld [vmem:[%s1 + $0x1c] sm:$0xf]
      %v426 = vld [vmem:[%s2] sm:$0x1]
      %v428 = vlaneseq
      %v429 = vshrl.u32 %v428, 7
      %v430 = vsub.s32 0, %v429
      %v431 = vrot.slane %v426, %v430
      %v441 = vunpack.c.l.b16 %v418
      %v442 = vunpack.c.l.b16 %v419
      %v443 = vunpack.c.l.b16 %v420
      %v444 = vunpack.c.l.b16 %v421
      %v445 = vunpack.c.l.b16 %v422
      %v446 = vunpack.c.l.b16 %v423
      %v447 = vunpack.c.l.b16 %v424
      %v448 = vunpack.c.l.b16 %v425
      %v449 = vpack.c.b16 %v442, %v441
      %v450 = vpack.c.b16 %v444, %v443
      %v451 = vpack.c.b16 %v446, %v445
      %v452 = vpack.c.b16 %v448, %v447
      %vm457 = vcmask 523264
      %v459 = vsel %vm457, %v398, 0
      %v462 = vsel %vm457, %v399, 0
      %v465 = vsel %vm457, %v400, 0
      %v468 = vsel %vm457, %v401, 0
      %v471 = vsel %vm457, %v402, 0
      %v474 = vsel %vm457, %v403, 0
      %v477 = vsel %vm457, %v404, 0
      %v480 = vsel %vm457, %v405, 0
      %v483 = vsel %vm457, %v406, 0
      %v486 = vsel %vm457, %v407, 0
      %v489 = vsel %vm457, %v408, 0
      %v492 = vsel %vm457, %v409, 0
      %v495 = vsel %vm457, %v410, 0
      %v498 = vsel %vm457, %v411, 0
      %v501 = vsel %vm457, %v412, 0
      %v504 = vsel %vm457, %v413, 0
      %v507 = vsel %vm457, %v414, 0
      %v510 = vsel %vm457, %v415, 0
      %v513 = vsel %vm457, %v416, 0
      %v516 = vsel %vm457, %v417, 0
      %518 = vmatprep.subr.bf16.mxu0 0
      %519 = vmatpush1.bf16.msra.mxu0 %v449
      %520 = vmatprep.subr.bf16.mxu0 0
      %521 = vmatpush1.bf16.msra.mxu0 %v450
      %522 = vmatprep.subr.bf16.mxu0 0
      %523 = vmatpush1.bf16.msra.mxu0 %v451
      %524 = vmatprep.subr.bf16.mxu0 0
      %525 = vmatpush1.bf16.msra.mxu0 %v452
      %526 = vmatprep.subr.bf16.mxu0 0
      %527 = vmatpush1.bf16.msra.mxu0 0
      %528 = vmatprep.subr.bf16.mxu0 0
      %529 = vmatpush1.bf16.msra.mxu0 0
      %530 = vmatprep.subr.bf16.mxu0 0
      %531 = vmatpush1.bf16.msra.mxu0 0
      %532 = vmatprep.subr.bf16.mxu0 0
      %533 = vmatpush1.bf16.msra.mxu0 0
      %534 = vmatprep.subr.bf16.mxu0 0
      %535 = vmatpush1.bf16.msra.mxu0 0
      %536 = vmatprep.subr.bf16.mxu0 0
      %537 = vmatpush1.bf16.msra.mxu0 0
      %538 = vmatprep.subr.bf16.mxu0 0
      %539 = vmatpush1.bf16.msra.mxu0 0
      %540 = vmatprep.subr.bf16.mxu0 0
      %541 = vmatpush1.bf16.msra.mxu0 0
      %542 = vmatprep.subr.bf16.mxu0 0
      %543 = vmatpush1.bf16.msra.mxu0 0
      %544 = vmatprep.subr.bf16.mxu0 0
      %545 = vmatpush1.bf16.msra.mxu0 0
      %546 = vmatprep.subr.bf16.mxu0 0
      %547 = vmatpush1.bf16.msra.mxu0 0
      %548 = vmatprep.subr.bf16.mxu0 0
      %549 = vmatpush1.bf16.msra.mxu0 0
      %550 = vmatprep.mubr.bf16.mxu0 0
      %551 = vmatmul.mubr.bf16.gmra.mrb[0].mxu0 %v459
      %v552 = vpop.f32.mrb[0].mxu0
      %v553 = vadd.f32 %v431, %v552
      %v554 = vpop.f32.mrb[0].mxu0
      %v555 = vpop.f32.mrb[0].mxu0
      %v556 = vadd.f32 %v431, %v555
      %v557 = vpop.f32.mrb[0].mxu0
      %558 = vmatprep.mubr.bf16.mxu0 0
      %559 = vmatmul.mubr.bf16.gmra.mrb[0].mxu0 %v462
      %v560 = vpop.f32.mrb[0].mxu0
      %v561 = vadd.f32 %v431, %v560
      %v562 = vpop.f32.mrb[0].mxu0
      %v563 = vpop.f32.mrb[0].mxu0
      %v564 = vadd.f32 %v431, %v563
      %v565 = vpop.f32.mrb[0].mxu0
      %566 = vmatprep.mubr.bf16.mxu0 0
      %567 = vmatmul.mubr.bf16.gmra.mrb[0].mxu0 %v465
      %v568 = vpop.f32.mrb[0].mxu0
      %v569 = vadd.f32 %v431, %v568
      %v570 = vpop.f32.mrb[0].mxu0
      %v571 = vpop.f32.mrb[0].mxu0
      %v572 = vadd.f32 %v431, %v571
      %v573 = vpop.f32.mrb[0].mxu0
      %574 = vmatprep.mubr.bf16.mxu0 0
      %575 = vmatmul.mubr.bf16.gmra.mrb[0].mxu0 %v468
      %v576 = vpop.f32.mrb[0].mxu0
      %v577 = vadd.f32 %v431, %v576
      %v578 = vpop.f32.mrb[0].mxu0
      %v579 = vpop.f32.mrb[0].mxu0
      %v580 = vadd.f32 %v431, %v579
      %v581 = vpop.f32.mrb[0].mxu0
      %582 = vmatprep.mubr.bf16.mxu0 0
      %583 = vmatmul.mubr.bf16.gmra.mrb[0].mxu0 %v471
      %v584 = vpop.f32.mrb[0].mxu0
      %v585 = vadd.f32 %v431, %v584
      %v586 = vpop.f32.mrb[0].mxu0
      %v587 = vpop.f32.mrb[0].mxu0
      %v588 = vadd.f32 %v431, %v587
      %v589 = vpop.f32.mrb[0].mxu0
      %590 = vmatprep.mubr.bf16.mxu0 0
      %591 = vmatmul.mubr.bf16.gmra.mrb[0].mxu0 %v474
      %v592 = vpop.f32.mrb[0].mxu0
      %v593 = vadd.f32 %v431, %v592
      %v594 = vpop.f32.mrb[0].mxu0
      %v595 = vpop.f32.mrb[0].mxu0
      %v596 = vadd.f32 %v431, %v595
      %v597 = vpop.f32.mrb[0].mxu0
      %598 = vmatprep.mubr.bf16.mxu0 0
      %599 = vmatmul.mubr.bf16.gmra.mrb[0].mxu0 %v477
      %v600 = vpop.f32.mrb[0].mxu0
      %v601 = vadd.f32 %v431, %v600
      %v602 = vpop.f32.mrb[0].mxu0
      %v603 = vpop.f32.mrb[0].mxu0
      %v604 = vadd.f32 %v431, %v603
      %v605 = vpop.f32.mrb[0].mxu0
      %606 = vmatprep.mubr.bf16.mxu0 0
      %607 = vmatmul.mubr.bf16.gmra.mrb[0].mxu0 %v480
      %v608 = vpop.f32.mrb[0].mxu0
      %v609 = vadd.f32 %v431, %v608
      %v610 = vpop.f32.mrb[0].mxu0
      %v611 = vpop.f32.mrb[0].mxu0
      %v612 = vadd.f32 %v431, %v611
      %v613 = vpop.f32.mrb[0].mxu0
      %614 = vmatprep.mubr.bf16.mxu0 0
      %615 = vmatmul.mubr.bf16.gmra.mrb[0].mxu0 %v483
      %v616 = vpop.f32.mrb[0].mxu0
      %v617 = vadd.f32 %v431, %v616
      %v618 = vpop.f32.mrb[0].mxu0
      %v619 = vpop.f32.mrb[0].mxu0
      %v620 = vadd.f32 %v431, %v619
      %v621 = vpop.f32.mrb[0].mxu0
      %622 = vmatprep.mubr.bf16.mxu0 0
      %623 = vmatmul.mubr.bf16.gmra.mrb[0].mxu0 %v486
      %v624 = vpop.f32.mrb[0].mxu0
      %v625 = vadd.f32 %v431, %v624
      %v626 = vpop.f32.mrb[0].mxu0
      %v627 = vpop.f32.mrb[0].mxu0
      %v628 = vadd.f32 %v431, %v627
      %v629 = vpop.f32.mrb[0].mxu0
      %630 = vmatprep.mubr.bf16.mxu0 0
      %631 = vmatmul.mubr.bf16.gmra.mrb[0].mxu0 %v489
      %v632 = vpop.f32.mrb[0].mxu0
      %v633 = vadd.f32 %v431, %v632
      %v634 = vpop.f32.mrb[0].mxu0
      %v635 = vpop.f32.mrb[0].mxu0
      %v636 = vadd.f32 %v431, %v635
      %v637 = vpop.f32.mrb[0].mxu0
      %638 = vmatprep.mubr.bf16.mxu0 0
      %639 = vmatmul.mubr.bf16.gmra.mrb[0].mxu0 %v492
      %v640 = vpop.f32.mrb[0].mxu0
      %v641 = vadd.f32 %v431, %v640
      %v642 = vpop.f32.mrb[0].mxu0
      %v643 = vpop.f32.mrb[0].mxu0
      %v644 = vadd.f32 %v431, %v643
      %v645 = vpop.f32.mrb[0].mxu0
      %646 = vmatprep.mubr.bf16.mxu0 0
      %647 = vmatmul.mubr.bf16.gmra.mrb[0].mxu0 %v495
      %v648 = vpop.f32.mrb[0].mxu0
      %v649 = vadd.f32 %v431, %v648
      %v650 = vpop.f32.mrb[0].mxu0
      %v651 = vpop.f32.mrb[0].mxu0
      %v652 = vadd.f32 %v431, %v651
      %v653 = vpop.f32.mrb[0].mxu0
      %654 = vmatprep.mubr.bf16.mxu0 0
      %655 = vmatmul.mubr.bf16.gmra.mrb[0].mxu0 %v498
      %v656 = vpop.f32.mrb[0].mxu0
      %v657 = vadd.f32 %v431, %v656
      %v658 = vpop.f32.mrb[0].mxu0
      %v659 = vpop.f32.mrb[0].mxu0
      %v660 = vadd.f32 %v431, %v659
      %v661 = vpop.f32.mrb[0].mxu0
      %662 = vmatprep.mubr.bf16.mxu0 0
      %663 = vmatmul.mubr.bf16.gmra.mrb[0].mxu0 %v501
      %v664 = vpop.f32.mrb[0].mxu0
      %v665 = vadd.f32 %v431, %v664
      %v666 = vpop.f32.mrb[0].mxu0
      %v667 = vpop.f32.mrb[0].mxu0
      %v668 = vadd.f32 %v431, %v667
      %v669 = vpop.f32.mrb[0].mxu0
      %670 = vmatprep.mubr.bf16.mxu0 0
      %671 = vmatmul.mubr.bf16.gmra.mrb[0].mxu0 %v504
      %v672 = vpop.f32.mrb[0].mxu0
      %v673 = vadd.f32 %v431, %v672
      %v674 = vpop.f32.mrb[0].mxu0
      %v675 = vpop.f32.mrb[0].mxu0
      %v676 = vadd.f32 %v431, %v675
      %v677 = vpop.f32.mrb[0].mxu0
      %678 = vmatprep.mubr.bf16.mxu0 0
      %679 = vmatmul.mubr.bf16.gmra.mrb[0].mxu0 %v507
      %v680 = vpop.f32.mrb[0].mxu0
      %v681 = vadd.f32 %v431, %v680
      %v682 = vpop.f32.mrb[0].mxu0
      %v683 = vpop.f32.mrb[0].mxu0
      %v684 = vadd.f32 %v431, %v683
      %v685 = vpop.f32.mrb[0].mxu0
      %686 = vmatprep.mubr.bf16.mxu0 0
      %687 = vmatmul.mubr.bf16.gmra.mrb[0].mxu0 %v510
      %v688 = vpop.f32.mrb[0].mxu0
      %v689 = vadd.f32 %v431, %v688
      %v690 = vpop.f32.mrb[0].mxu0
      %v691 = vpop.f32.mrb[0].mxu0
      %v692 = vadd.f32 %v431, %v691
      %v693 = vpop.f32.mrb[0].mxu0
      %694 = vmatprep.mubr.bf16.mxu0 0
      %695 = vmatmul.mubr.bf16.gmra.mrb[0].mxu0 %v513
      %v696 = vpop.f32.mrb[0].mxu0
      %v697 = vadd.f32 %v431, %v696
      %v698 = vpop.f32.mrb[0].mxu0
      %v699 = vpop.f32.mrb[0].mxu0
      %v700 = vadd.f32 %v431, %v699
      %v701 = vpop.f32.mrb[0].mxu0
      %702 = vmatprep.mubr.bf16.mxu0 0
      %703 = vmatmul.mubr.bf16.gmra.mrb[0].mxu0 %v516
      %v704 = vpop.f32.mrb[0].mxu0
      %v705 = vadd.f32 %v431, %v704
      %v706 = vpop.f32.mrb[0].mxu0
      %v707 = vpop.f32.mrb[0].mxu0
      %v708 = vadd.f32 %v431, %v707
      %v709 = vpop.f32.mrb[0].mxu0
      %710 = vdwg.mxu0
      %v711 = vmax.f32 %v553, 0.0
      %v712 = vmax.f32 %v556, 0.0
      %v713 = vmax.f32 %v561, 0.0
      %v714 = vmax.f32 %v564, 0.0
      %v715 = vmax.f32 %v569, 0.0
      %v716 = vmax.f32 %v572, 0.0
      %v717 = vmax.f32 %v577, 0.0
      %v718 = vmax.f32 %v580, 0.0
      %v719 = vmax.f32 %v585, 0.0
      %v720 = vmax.f32 %v588, 0.0
      %v721 = vmax.f32 %v593, 0.0
      %v722 = vmax.f32 %v596, 0.0
      %v723 = vmax.f32 %v601, 0.0
      %v724 = vmax.f32 %v604, 0.0
      %v725 = vmax.f32 %v609, 0.0
      %v726 = vmax.f32 %v612, 0.0
      %v727 = vmax.f32 %v617, 0.0
      %v728 = vmax.f32 %v620, 0.0
      %v729 = vmax.f32 %v625, 0.0
      %v730 = vmax.f32 %v628, 0.0
      %v731 = vmax.f32 %v633, 0.0
      %v732 = vmax.f32 %v636, 0.0
      %v733 = vmax.f32 %v641, 0.0
      %v734 = vmax.f32 %v644, 0.0
      %v735 = vmax.f32 %v649, 0.0
      %v736 = vmax.f32 %v652, 0.0
      %v737 = vmax.f32 %v657, 0.0
      %v738 = vmax.f32 %v660, 0.0
      %v739 = vmax.f32 %v665, 0.0
      %v740 = vmax.f32 %v668, 0.0
      %v741 = vmax.f32 %v673, 0.0
      %v742 = vmax.f32 %v676, 0.0
      %v743 = vmax.f32 %v681, 0.0
      %v744 = vmax.f32 %v684, 0.0
      %v745 = vmax.f32 %v689, 0.0
      %v746 = vmax.f32 %v692, 0.0
      %v747 = vmax.f32 %v697, 0.0
      %v748 = vmax.f32 %v700, 0.0
      %v749 = vmax.f32 %v705, 0.0
      %v750 = vmax.f32 %v708, 0.0
      %v751 = vpack.c.bf16 %v712, %v711
      %v752 = vpack.c.bf16 %v714, %v713
      %v753 = vpack.c.bf16 %v716, %v715
      %v754 = vpack.c.bf16 %v718, %v717
      %v755 = vpack.c.bf16 %v720, %v719
      %v756 = vpack.c.bf16 %v722, %v721
      %v757 = vpack.c.bf16 %v724, %v723
      %v758 = vpack.c.bf16 %v726, %v725
      %v759 = vpack.c.bf16 %v728, %v727
      %v760 = vpack.c.bf16 %v730, %v729
      %v761 = vpack.c.bf16 %v732, %v731
      %v762 = vpack.c.bf16 %v734, %v733
      %v763 = vpack.c.bf16 %v736, %v735
      %v764 = vpack.c.bf16 %v738, %v737
      %v765 = vpack.c.bf16 %v740, %v739
      %v766 = vpack.c.bf16 %v742, %v741
      %v767 = vpack.c.bf16 %v744, %v743
      %v768 = vpack.c.bf16 %v746, %v745
      %v769 = vpack.c.bf16 %v748, %v747
      %v770 = vpack.c.bf16 %v750, %v749
      %v771 = vld [vmem:[%s3] sm:$0xf]
      %v772 = vld [vmem:[%s3 + $0x4] sm:$0xf]
      %v773 = vld [vmem:[%s3 + $0x8] sm:$0xf]
      %v774 = vld [vmem:[%s3 + $0xc] sm:$0xf]
      %v775 = vld [vmem:[%s3 + $0x10] sm:$0xf]
      %v776 = vld [vmem:[%s3 + $0x14] sm:$0xf]
      %v777 = vld [vmem:[%s3 + $0x18] sm:$0xf]
      %v778 = vld [vmem:[%s3 + $0x1c] sm:$0xf]
      %v779 = vld [vmem:[%s3 + $0x20] sm:$0xf]
      %v780 = vld [vmem:[%s3 + $0x24] sm:$0xf]
      %v781 = vld [vmem:[%s3 + $0x28] sm:$0xf]
      %v782 = vld [vmem:[%s3 + $0x2c] sm:$0xf]
      %v783 = vld [vmem:[%s3 + $0x30] sm:$0xf]
      %v784 = vld [vmem:[%s3 + $0x34] sm:$0xf]
      %v785 = vld [vmem:[%s3 + $0x38] sm:$0xf]
      %v786 = vld [vmem:[%s3 + $0x3c] sm:$0xf]
      %v787 = vld [vmem:[%s4] sm:$0x1]
      %v789 = vlaneseq
      %v790 = vshrl.u32 %v789, 7
      %v791 = vsub.s32 0, %v790
      %v792 = vrot.slane %v787, %v791
      %v810 = vunpack.c.l.b16 %v771
      %v811 = vunpack.c.l.b16 %v772
      %v812 = vunpack.c.l.b16 %v773
      %v813 = vunpack.c.l.b16 %v774
      %v814 = vunpack.c.l.b16 %v775
      %v815 = vunpack.c.l.b16 %v776
      %v816 = vunpack.c.l.b16 %v777
      %v817 = vunpack.c.l.b16 %v778
      %v818 = vunpack.c.l.b16 %v779
      %v819 = vunpack.c.l.b16 %v780
      %v820 = vunpack.c.l.b16 %v781
      %v821 = vunpack.c.l.b16 %v782
      %v822 = vunpack.c.l.b16 %v783
      %v823 = vunpack.c.l.b16 %v784
      %v824 = vunpack.c.l.b16 %v785
      %v825 = vunpack.c.l.b16 %v786
      %v826 = vpack.c.b16 %v811, %v810
      %v827 = vpack.c.b16 %v813, %v812
      %v828 = vpack.c.b16 %v815, %v814
      %v829 = vpack.c.b16 %v817, %v816
      %v830 = vpack.c.b16 %v819, %v818
      %v831 = vpack.c.b16 %v821, %v820
      %v832 = vpack.c.b16 %v823, %v822
      %v833 = vpack.c.b16 %v825, %v824
      %842 = vmatprep.subr.bf16.mxu0 0
      %843 = vmatpush1.bf16.msra.mxu0 %v826
      %844 = vmatprep.subr.bf16.mxu0 0
      %845 = vmatpush1.bf16.msra.mxu0 %v827
      %846 = vmatprep.subr.bf16.mxu0 0
      %847 = vmatpush1.bf16.msra.mxu0 %v828
      %848 = vmatprep.subr.bf16.mxu0 0
      %849 = vmatpush1.bf16.msra.mxu0 %v829
      %850 = vmatprep.subr.bf16.mxu0 0
      %851 = vmatpush1.bf16.msra.mxu0 %v830
      %852 = vmatprep.subr.bf16.mxu0 0
      %853 = vmatpush1.bf16.msra.mxu0 %v831
      %854 = vmatprep.subr.bf16.mxu0 0
      %855 = vmatpush1.bf16.msra.mxu0 %v832
      %856 = vmatprep.subr.bf16.mxu0 0
      %857 = vmatpush1.bf16.msra.mxu0 %v833
      %858 = vmatprep.subr.bf16.mxu0 0
      %859 = vmatpush1.bf16.msra.mxu0 0
      %860 = vmatprep.subr.bf16.mxu0 0
      %861 = vmatpush1.bf16.msra.mxu0 0
      %862 = vmatprep.subr.bf16.mxu0 0
      %863 = vmatpush1.bf16.msra.mxu0 0
      %864 = vmatprep.subr.bf16.mxu0 0
      %865 = vmatpush1.bf16.msra.mxu0 0
      %866 = vmatprep.subr.bf16.mxu0 0
      %867 = vmatpush1.bf16.msra.mxu0 0
      %868 = vmatprep.subr.bf16.mxu0 0
      %869 = vmatpush1.bf16.msra.mxu0 0
      %870 = vmatprep.subr.bf16.mxu0 0
      %871 = vmatpush1.bf16.msra.mxu0 0
      %872 = vmatprep.subr.bf16.mxu0 0
      %873 = vmatpush1.bf16.msra.mxu0 0
      %874 = vmatprep.mubr.bf16.mxu0 0
      %875 = vmatmul.mubr.bf16.gmra.mrb[0].mxu0 %v751
      %v876 = vpop.f32.mrb[0].mxu0
      %v877 = vadd.f32 %v792, %v876
      %v878 = vpop.f32.mrb[0].mxu0
      %v879 = vpop.f32.mrb[0].mxu0
      %v880 = vadd.f32 %v792, %v879
      %v881 = vpop.f32.mrb[0].mxu0
      %882 = vmatprep.mubr.bf16.mxu0 0
      %883 = vmatmul.mubr.bf16.gmra.mrb[0].mxu0 %v752
      %v884 = vpop.f32.mrb[0].mxu0
      %v885 = vadd.f32 %v792, %v884
      %v886 = vpop.f32.mrb[0].mxu0
      %v887 = vpop.f32.mrb[0].mxu0
      %v888 = vadd.f32 %v792, %v887
      %v889 = vpop.f32.mrb[0].mxu0
      %890 = vmatprep.mubr.bf16.mxu0 0
      %891 = vmatmul.mubr.bf16.gmra.mrb[0].mxu0 %v753
      %v892 = vpop.f32.mrb[0].mxu0
      %v893 = vadd.f32 %v792, %v892
      %v894 = vpop.f32.mrb[0].mxu0
      %v895 = vpop.f32.mrb[0].mxu0
      %v896 = vadd.f32 %v792, %v895
      %v897 = vpop.f32.mrb[0].mxu0
      %898 = vmatprep.mubr.bf16.mxu0 0
      %899 = vmatmul.mubr.bf16.gmra.mrb[0].mxu0 %v754
      %v900 = vpop.f32.mrb[0].mxu0
      %v901 = vadd.f32 %v792, %v900
      %v902 = vpop.f32.mrb[0].mxu0
      %v903 = vpop.f32.mrb[0].mxu0
      %v904 = vadd.f32 %v792, %v903
      %v905 = vpop.f32.mrb[0].mxu0
      %906 = vmatprep.mubr.bf16.mxu0 0
      %907 = vmatmul.mubr.bf16.gmra.mrb[0].mxu0 %v755
      %v908 = vpop.f32.mrb[0].mxu0
      %v909 = vadd.f32 %v792, %v908
      %v910 = vpop.f32.mrb[0].mxu0
      %v911 = vpop.f32.mrb[0].mxu0
      %v912 = vadd.f32 %v792, %v911
      %v913 = vpop.f32.mrb[0].mxu0
      %914 = vmatprep.mubr.bf16.mxu0 0
      %915 = vmatmul.mubr.bf16.gmra.mrb[0].mxu0 %v756
      %v916 = vpop.f32.mrb[0].mxu0
      %v917 = vadd.f32 %v792, %v916
      %v918 = vpop.f32.mrb[0].mxu0
      %v919 = vpop.f32.mrb[0].mxu0
      %v920 = vadd.f32 %v792, %v919
      %v921 = vpop.f32.mrb[0].mxu0
      %922 = vmatprep.mubr.bf16.mxu0 0
      %923 = vmatmul.mubr.bf16.gmra.mrb[0].mxu0 %v757
      %v924 = vpop.f32.mrb[0].mxu0
      %v925 = vadd.f32 %v792, %v924
      %v926 = vpop.f32.mrb[0].mxu0
      %v927 = vpop.f32.mrb[0].mxu0
      %v928 = vadd.f32 %v792, %v927
      %v929 = vpop.f32.mrb[0].mxu0
      %930 = vmatprep.mubr.bf16.mxu0 0
      %931 = vmatmul.mubr.bf16.gmra.mrb[0].mxu0 %v758
      %v932 = vpop.f32.mrb[0].mxu0
      %v933 = vadd.f32 %v792, %v932
      %v934 = vpop.f32.mrb[0].mxu0
      %v935 = vpop.f32.mrb[0].mxu0
      %v936 = vadd.f32 %v792, %v935
      %v937 = vpop.f32.mrb[0].mxu0
      %938 = vmatprep.mubr.bf16.mxu0 0
      %939 = vmatmul.mubr.bf16.gmra.mrb[0].mxu0 %v759
      %v940 = vpop.f32.mrb[0].mxu0
      %v941 = vadd.f32 %v792, %v940
      %v942 = vpop.f32.mrb[0].mxu0
      %v943 = vpop.f32.mrb[0].mxu0
      %v944 = vadd.f32 %v792, %v943
      %v945 = vpop.f32.mrb[0].mxu0
      %946 = vmatprep.mubr.bf16.mxu0 0
      %947 = vmatmul.mubr.bf16.gmra.mrb[0].mxu0 %v760
      %v948 = vpop.f32.mrb[0].mxu0
      %v949 = vadd.f32 %v792, %v948
      %v950 = vpop.f32.mrb[0].mxu0
      %v951 = vpop.f32.mrb[0].mxu0
      %v952 = vadd.f32 %v792, %v951
      %v953 = vpop.f32.mrb[0].mxu0
      %954 = vmatprep.mubr.bf16.mxu0 0
      %955 = vmatmul.mubr.bf16.gmra.mrb[0].mxu0 %v761
      %v956 = vpop.f32.mrb[0].mxu0
      %v957 = vadd.f32 %v792, %v956
      %v958 = vpop.f32.mrb[0].mxu0
      %v959 = vpop.f32.mrb[0].mxu0
      %v960 = vadd.f32 %v792, %v959
      %v961 = vpop.f32.mrb[0].mxu0
      %962 = vmatprep.mubr.bf16.mxu0 0
      %963 = vmatmul.mubr.bf16.gmra.mrb[0].mxu0 %v762
      %v964 = vpop.f32.mrb[0].mxu0
      %v965 = vadd.f32 %v792, %v964
      %v966 = vpop.f32.mrb[0].mxu0
      %v967 = vpop.f32.mrb[0].mxu0
      %v968 = vadd.f32 %v792, %v967
      %v969 = vpop.f32.mrb[0].mxu0
      %970 = vmatprep.mubr.bf16.mxu0 0
      %971 = vmatmul.mubr.bf16.gmra.mrb[0].mxu0 %v763
      %v972 = vpop.f32.mrb[0].mxu0
      %v973 = vadd.f32 %v792, %v972
      %v974 = vpop.f32.mrb[0].mxu0
      %v975 = vpop.f32.mrb[0].mxu0
      %v976 = vadd.f32 %v792, %v975
      %v977 = vpop.f32.mrb[0].mxu0
      %978 = vmatprep.mubr.bf16.mxu0 0
      %979 = vmatmul.mubr.bf16.gmra.mrb[0].mxu0 %v764
      %v980 = vpop.f32.mrb[0].mxu0
      %v981 = vadd.f32 %v792, %v980
      %v982 = vpop.f32.mrb[0].mxu0
      %v983 = vpop.f32.mrb[0].mxu0
      %v984 = vadd.f32 %v792, %v983
      %v985 = vpop.f32.mrb[0].mxu0
      %986 = vmatprep.mubr.bf16.mxu0 0
      %987 = vmatmul.mubr.bf16.gmra.mrb[0].mxu0 %v765
      %v988 = vpop.f32.mrb[0].mxu0
      %v989 = vadd.f32 %v792, %v988
      %v990 = vpop.f32.mrb[0].mxu0
      %v991 = vpop.f32.mrb[0].mxu0
      %v992 = vadd.f32 %v792, %v991
      %v993 = vpop.f32.mrb[0].mxu0
      %994 = vmatprep.mubr.bf16.mxu0 0
      %995 = vmatmul.mubr.bf16.gmra.mrb[0].mxu0 %v766
      %v996 = vpop.f32.mrb[0].mxu0
      %v997 = vadd.f32 %v792, %v996
      %v998 = vpop.f32.mrb[0].mxu0
      %v999 = vpop.f32.mrb[0].mxu0
      %v1000 = vadd.f32 %v792, %v999
      %v1001 = vpop.f32.mrb[0].mxu0
      %1002 = vmatprep.mubr.bf16.mxu0 0
      %1003 = vmatmul.mubr.bf16.gmra.mrb[0].mxu0 %v767
      %v1004 = vpop.f32.mrb[0].mxu0
      %v1005 = vadd.f32 %v792, %v1004
      %v1006 = vpop.f32.mrb[0].mxu0
      %v1007 = vpop.f32.mrb[0].mxu0
      %v1008 = vadd.f32 %v792, %v1007
      %v1009 = vpop.f32.mrb[0].mxu0
      %1010 = vmatprep.mubr.bf16.mxu0 0
      %1011 = vmatmul.mubr.bf16.gmra.mrb[0].mxu0 %v768
      %v1012 = vpop.f32.mrb[0].mxu0
      %v1013 = vadd.f32 %v792, %v1012
      %v1014 = vpop.f32.mrb[0].mxu0
      %v1015 = vpop.f32.mrb[0].mxu0
      %v1016 = vadd.f32 %v792, %v1015
      %v1017 = vpop.f32.mrb[0].mxu0
      %1018 = vmatprep.mubr.bf16.mxu0 0
      %1019 = vmatmul.mubr.bf16.gmra.mrb[0].mxu0 %v769
      %v1020 = vpop.f32.mrb[0].mxu0
      %v1021 = vadd.f32 %v792, %v1020
      %v1022 = vpop.f32.mrb[0].mxu0
      %v1023 = vpop.f32.mrb[0].mxu0
      %v1024 = vadd.f32 %v792, %v1023
      %v1025 = vpop.f32.mrb[0].mxu0
      %1026 = vmatprep.mubr.bf16.mxu0 0
      %1027 = vmatmul.mubr.bf16.gmra.mrb[0].mxu0 %v770
      %v1028 = vpop.f32.mrb[0].mxu0
      %v1029 = vadd.f32 %v792, %v1028
      %v1030 = vpop.f32.mrb[0].mxu0
      %v1031 = vpop.f32.mrb[0].mxu0
      %v1032 = vadd.f32 %v792, %v1031
      %v1033 = vpop.f32.mrb[0].mxu0
      %1034 = vdwg.mxu0
      %v1035 = vmax.f32 %v877, 0.0
      %v1036 = vmax.f32 %v880, 0.0
      %v1037 = vmax.f32 %v885, 0.0
      %v1038 = vmax.f32 %v888, 0.0
      %v1039 = vmax.f32 %v893, 0.0
      %v1040 = vmax.f32 %v896, 0.0
      %v1041 = vmax.f32 %v901, 0.0
      %v1042 = vmax.f32 %v904, 0.0
      %v1043 = vmax.f32 %v909, 0.0
      %v1044 = vmax.f32 %v912, 0.0
      %v1045 = vmax.f32 %v917, 0.0
      %v1046 = vmax.f32 %v920, 0.0
      %v1047 = vmax.f32 %v925, 0.0
      %v1048 = vmax.f32 %v928, 0.0
      %v1049 = vmax.f32 %v933, 0.0
      %v1050 = vmax.f32 %v936, 0.0
      %v1051 = vmax.f32 %v941, 0.0
      %v1052 = vmax.f32 %v944, 0.0
      %v1053 = vmax.f32 %v949, 0.0
      %v1054 = vmax.f32 %v952, 0.0
      %v1055 = vmax.f32 %v957, 0.0
      %v1056 = vmax.f32 %v960, 0.0
      %v1057 = vmax.f32 %v965, 0.0
      %v1058 = vmax.f32 %v968, 0.0
      %v1059 = vmax.f32 %v973, 0.0
      %v1060 = vmax.f32 %v976, 0.0
      %v1061 = vmax.f32 %v981, 0.0
      %v1062 = vmax.f32 %v984, 0.0
      %v1063 = vmax.f32 %v989, 0.0
      %v1064 = vmax.f32 %v992, 0.0
      %v1065 = vmax.f32 %v997, 0.0
      %v1066 = vmax.f32 %v1000, 0.0
      %v1067 = vmax.f32 %v1005, 0.0
      %v1068 = vmax.f32 %v1008, 0.0
      %v1069 = vmax.f32 %v1013, 0.0
      %v1070 = vmax.f32 %v1016, 0.0
      %v1071 = vmax.f32 %v1021, 0.0
      %v1072 = vmax.f32 %v1024, 0.0
      %v1073 = vmax.f32 %v1029, 0.0
      %v1074 = vmax.f32 %v1032, 0.0
      %v1075 = vpack.c.bf16 %v1036, %v1035
      %v1076 = vpack.c.bf16 %v1038, %v1037
      %v1077 = vpack.c.bf16 %v1040, %v1039
      %v1078 = vpack.c.bf16 %v1042, %v1041
      %v1079 = vpack.c.bf16 %v1044, %v1043
      %v1080 = vpack.c.bf16 %v1046, %v1045
      %v1081 = vpack.c.bf16 %v1048, %v1047
      %v1082 = vpack.c.bf16 %v1050, %v1049
      %v1083 = vpack.c.bf16 %v1052, %v1051
      %v1084 = vpack.c.bf16 %v1054, %v1053
      %v1085 = vpack.c.bf16 %v1056, %v1055
      %v1086 = vpack.c.bf16 %v1058, %v1057
      %v1087 = vpack.c.bf16 %v1060, %v1059
      %v1088 = vpack.c.bf16 %v1062, %v1061
      %v1089 = vpack.c.bf16 %v1064, %v1063
      %v1090 = vpack.c.bf16 %v1066, %v1065
      %v1091 = vpack.c.bf16 %v1068, %v1067
      %v1092 = vpack.c.bf16 %v1070, %v1069
      %v1093 = vpack.c.bf16 %v1072, %v1071
      %v1094 = vpack.c.bf16 %v1074, %v1073
      %v1095 = vld [vmem:[%s5] sm:$0xf]
      %v1096 = vld [vmem:[%s5 + $0x4] sm:$0xf]
      %v1097 = vld [vmem:[%s5 + $0x8] sm:$0xf]
      %v1098 = vld [vmem:[%s5 + $0xc] sm:$0xf]
      %v1099 = vld [vmem:[%s5 + $0x10] sm:$0xf]
      %v1100 = vld [vmem:[%s5 + $0x14] sm:$0xf]
      %v1101 = vld [vmem:[%s5 + $0x18] sm:$0xf]
      %v1102 = vld [vmem:[%s5 + $0x1c] sm:$0xf]
      %v1103 = vld [vmem:[%s5 + $0x20] sm:$0xf]
      %v1104 = vld [vmem:[%s5 + $0x24] sm:$0xf]
      %v1105 = vld [vmem:[%s5 + $0x28] sm:$0xf]
      %v1106 = vld [vmem:[%s5 + $0x2c] sm:$0xf]
      %v1107 = vld [vmem:[%s5 + $0x30] sm:$0xf]
      %v1108 = vld [vmem:[%s5 + $0x34] sm:$0xf]
      %v1109 = vld [vmem:[%s5 + $0x38] sm:$0xf]
      %v1110 = vld [vmem:[%s5 + $0x3c] sm:$0xf]
      %v1111 = vld [vmem:[%s6] sm:$0x1]
      %v1113 = vlaneseq
      %v1114 = vshrl.u32 %v1113, 7
      %v1115 = vsub.s32 0, %v1114
      %v1116 = vrot.slane %v1111, %v1115
      %v1134 = vunpack.c.l.b16 %v1095
      %v1135 = vunpack.c.l.b16 %v1096
      %v1136 = vunpack.c.l.b16 %v1097
      %v1137 = vunpack.c.l.b16 %v1098
      %v1138 = vunpack.c.l.b16 %v1099
      %v1139 = vunpack.c.l.b16 %v1100
      %v1140 = vunpack.c.l.b16 %v1101
      %v1141 = vunpack.c.l.b16 %v1102
      %v1142 = vunpack.c.l.b16 %v1103
      %v1143 = vunpack.c.l.b16 %v1104
      %v1144 = vunpack.c.l.b16 %v1105
      %v1145 = vunpack.c.l.b16 %v1106
      %v1146 = vunpack.c.l.b16 %v1107
      %v1147 = vunpack.c.l.b16 %v1108
      %v1148 = vunpack.c.l.b16 %v1109
      %v1149 = vunpack.c.l.b16 %v1110
      %v1150 = vpack.c.b16 %v1135, %v1134
      %v1151 = vpack.c.b16 %v1137, %v1136
      %v1152 = vpack.c.b16 %v1139, %v1138
      %v1153 = vpack.c.b16 %v1141, %v1140
      %v1154 = vpack.c.b16 %v1143, %v1142
      %v1155 = vpack.c.b16 %v1145, %v1144
      %v1156 = vpack.c.b16 %v1147, %v1146
      %v1157 = vpack.c.b16 %v1149, %v1148
      %1166 = vmatprep.subr.bf16.mxu0 0
      %1167 = vmatpush1.bf16.msra.mxu0 %v1150
      %1168 = vmatprep.subr.bf16.mxu0 0
      %1169 = vmatpush1.bf16.msra.mxu0 %v1151
      %1170 = vmatprep.subr.bf16.mxu0 0
      %1171 = vmatpush1.bf16.msra.mxu0 %v1152
      %1172 = vmatprep.subr.bf16.mxu0 0
      %1173 = vmatpush1.bf16.msra.mxu0 %v1153
      %1174 = vmatprep.subr.bf16.mxu0 0
      %1175 = vmatpush1.bf16.msra.mxu0 %v1154
      %1176 = vmatprep.subr.bf16.mxu0 0
      %1177 = vmatpush1.bf16.msra.mxu0 %v1155
      %1178 = vmatprep.subr.bf16.mxu0 0
      %1179 = vmatpush1.bf16.msra.mxu0 %v1156
      %1180 = vmatprep.subr.bf16.mxu0 0
      %1181 = vmatpush1.bf16.msra.mxu0 %v1157
      %1182 = vmatprep.subr.bf16.mxu0 0
      %1183 = vmatpush1.bf16.msra.mxu0 0
      %1184 = vmatprep.subr.bf16.mxu0 0
      %1185 = vmatpush1.bf16.msra.mxu0 0
      %1186 = vmatprep.subr.bf16.mxu0 0
      %1187 = vmatpush1.bf16.msra.mxu0 0
      %1188 = vmatprep.subr.bf16.mxu0 0
      %1189 = vmatpush1.bf16.msra.mxu0 0
      %1190 = vmatprep.subr.bf16.mxu0 0
      %1191 = vmatpush1.bf16.msra.mxu0 0
      %1192 = vmatprep.subr.bf16.mxu0 0
      %1193 = vmatpush1.bf16.msra.mxu0 0
      %1194 = vmatprep.subr.bf16.mxu0 0
      %1195 = vmatpush1.bf16.msra.mxu0 0
      %1196 = vmatprep.subr.bf16.mxu0 0
      %1197 = vmatpush1.bf16.msra.mxu0 0
      %1198 = vmatprep.mubr.bf16.mxu0 0
      %1199 = vmatmul.mubr.bf16.gmra.mrb[0].mxu0 %v1075
      %v1200 = vpop.f32.mrb[0].mxu0
      %v1201 = vadd.f32 %v1116, %v1200
      %v1202 = vpop.f32.mrb[0].mxu0
      %v1203 = vpop.f32.mrb[0].mxu0
      %v1204 = vadd.f32 %v1116, %v1203
      %v1205 = vpop.f32.mrb[0].mxu0
      %1206 = vmatprep.mubr.bf16.mxu0 0
      %1207 = vmatmul.mubr.bf16.gmra.mrb[0].mxu0 %v1076
      %v1208 = vpop.f32.mrb[0].mxu0
      %v1209 = vadd.f32 %v1116, %v1208
      %v1210 = vpop.f32.mrb[0].mxu0
      %v1211 = vpop.f32.mrb[0].mxu0
      %v1212 = vadd.f32 %v1116, %v1211
      %v1213 = vpop.f32.mrb[0].mxu0
      %1214 = vmatprep.mubr.bf16.mxu0 0
      %1215 = vmatmul.mubr.bf16.gmra.mrb[0].mxu0 %v1077
      %v1216 = vpop.f32.mrb[0].mxu0
      %v1217 = vadd.f32 %v1116, %v1216
      %v1218 = vpop.f32.mrb[0].mxu0
      %v1219 = vpop.f32.mrb[0].mxu0
      %v1220 = vadd.f32 %v1116, %v1219
      %v1221 = vpop.f32.mrb[0].mxu0
      %1222 = vmatprep.mubr.bf16.mxu0 0
      %1223 = vmatmul.mubr.bf16.gmra.mrb[0].mxu0 %v1078
      %v1224 = vpop.f32.mrb[0].mxu0
      %v1225 = vadd.f32 %v1116, %v1224
      %v1226 = vpop.f32.mrb[0].mxu0
      %v1227 = vpop.f32.mrb[0].mxu0
      %v1228 = vadd.f32 %v1116, %v1227
      %v1229 = vpop.f32.mrb[0].mxu0
      %1230 = vmatprep.mubr.bf16.mxu0 0
      %1231 = vmatmul.mubr.bf16.gmra.mrb[0].mxu0 %v1079
      %v1232 = vpop.f32.mrb[0].mxu0
      %v1233 = vadd.f32 %v1116, %v1232
      %v1234 = vpop.f32.mrb[0].mxu0
      %v1235 = vpop.f32.mrb[0].mxu0
      %v1236 = vadd.f32 %v1116, %v1235
      %v1237 = vpop.f32.mrb[0].mxu0
      %1238 = vmatprep.mubr.bf16.mxu0 0
      %1239 = vmatmul.mubr.bf16.gmra.mrb[0].mxu0 %v1080
      %v1240 = vpop.f32.mrb[0].mxu0
      %v1241 = vadd.f32 %v1116, %v1240
      %v1242 = vpop.f32.mrb[0].mxu0
      %v1243 = vpop.f32.mrb[0].mxu0
      %v1244 = vadd.f32 %v1116, %v1243
      %v1245 = vpop.f32.mrb[0].mxu0
      %1246 = vmatprep.mubr.bf16.mxu0 0
      %1247 = vmatmul.mubr.bf16.gmra.mrb[0].mxu0 %v1081
      %v1248 = vpop.f32.mrb[0].mxu0
      %v1249 = vadd.f32 %v1116, %v1248
      %v1250 = vpop.f32.mrb[0].mxu0
      %v1251 = vpop.f32.mrb[0].mxu0
      %v1252 = vadd.f32 %v1116, %v1251
      %v1253 = vpop.f32.mrb[0].mxu0
      %1254 = vmatprep.mubr.bf16.mxu0 0
      %1255 = vmatmul.mubr.bf16.gmra.mrb[0].mxu0 %v1082
      %v1256 = vpop.f32.mrb[0].mxu0
      %v1257 = vadd.f32 %v1116, %v1256
      %v1258 = vpop.f32.mrb[0].mxu0
      %v1259 = vpop.f32.mrb[0].mxu0
      %v1260 = vadd.f32 %v1116, %v1259
      %v1261 = vpop.f32.mrb[0].mxu0
      %1262 = vmatprep.mubr.bf16.mxu0 0
      %1263 = vmatmul.mubr.bf16.gmra.mrb[0].mxu0 %v1083
      %v1264 = vpop.f32.mrb[0].mxu0
      %v1265 = vadd.f32 %v1116, %v1264
      %v1266 = vpop.f32.mrb[0].mxu0
      %v1267 = vpop.f32.mrb[0].mxu0
      %v1268 = vadd.f32 %v1116, %v1267
      %v1269 = vpop.f32.mrb[0].mxu0
      %1270 = vmatprep.mubr.bf16.mxu0 0
      %1271 = vmatmul.mubr.bf16.gmra.mrb[0].mxu0 %v1084
      %v1272 = vpop.f32.mrb[0].mxu0
      %v1273 = vadd.f32 %v1116, %v1272
      %v1274 = vpop.f32.mrb[0].mxu0
      %v1275 = vpop.f32.mrb[0].mxu0
      %v1276 = vadd.f32 %v1116, %v1275
      %v1277 = vpop.f32.mrb[0].mxu0
      %1278 = vmatprep.mubr.bf16.mxu0 0
      %1279 = vmatmul.mubr.bf16.gmra.mrb[0].mxu0 %v1085
      %v1280 = vpop.f32.mrb[0].mxu0
      %v1281 = vadd.f32 %v1116, %v1280
      %v1282 = vpop.f32.mrb[0].mxu0
      %v1283 = vpop.f32.mrb[0].mxu0
      %v1284 = vadd.f32 %v1116, %v1283
      %v1285 = vpop.f32.mrb[0].mxu0
      %1286 = vmatprep.mubr.bf16.mxu0 0
      %1287 = vmatmul.mubr.bf16.gmra.mrb[0].mxu0 %v1086
      %v1288 = vpop.f32.mrb[0].mxu0
      %v1289 = vadd.f32 %v1116, %v1288
      %v1290 = vpop.f32.mrb[0].mxu0
      %v1291 = vpop.f32.mrb[0].mxu0
      %v1292 = vadd.f32 %v1116, %v1291
      %v1293 = vpop.f32.mrb[0].mxu0
      %1294 = vmatprep.mubr.bf16.mxu0 0
      %1295 = vmatmul.mubr.bf16.gmra.mrb[0].mxu0 %v1087
      %v1296 = vpop.f32.mrb[0].mxu0
      %v1297 = vadd.f32 %v1116, %v1296
      %v1298 = vpop.f32.mrb[0].mxu0
      %v1299 = vpop.f32.mrb[0].mxu0
      %v1300 = vadd.f32 %v1116, %v1299
      %v1301 = vpop.f32.mrb[0].mxu0
      %1302 = vmatprep.mubr.bf16.mxu0 0
      %1303 = vmatmul.mubr.bf16.gmra.mrb[0].mxu0 %v1088
      %v1304 = vpop.f32.mrb[0].mxu0
      %v1305 = vadd.f32 %v1116, %v1304
      %v1306 = vpop.f32.mrb[0].mxu0
      %v1307 = vpop.f32.mrb[0].mxu0
      %v1308 = vadd.f32 %v1116, %v1307
      %v1309 = vpop.f32.mrb[0].mxu0
      %1310 = vmatprep.mubr.bf16.mxu0 0
      %1311 = vmatmul.mubr.bf16.gmra.mrb[0].mxu0 %v1089
      %v1312 = vpop.f32.mrb[0].mxu0
      %v1313 = vadd.f32 %v1116, %v1312
      %v1314 = vpop.f32.mrb[0].mxu0
      %v1315 = vpop.f32.mrb[0].mxu0
      %v1316 = vadd.f32 %v1116, %v1315
      %v1317 = vpop.f32.mrb[0].mxu0
      %1318 = vmatprep.mubr.bf16.mxu0 0
      %1319 = vmatmul.mubr.bf16.gmra.mrb[0].mxu0 %v1090
      %v1320 = vpop.f32.mrb[0].mxu0
      %v1321 = vadd.f32 %v1116, %v1320
      %v1322 = vpop.f32.mrb[0].mxu0
      %v1323 = vpop.f32.mrb[0].mxu0
      %v1324 = vadd.f32 %v1116, %v1323
      %v1325 = vpop.f32.mrb[0].mxu0
      %1326 = vmatprep.mubr.bf16.mxu0 0
      %1327 = vmatmul.mubr.bf16.gmra.mrb[0].mxu0 %v1091
      %v1328 = vpop.f32.mrb[0].mxu0
      %v1329 = vadd.f32 %v1116, %v1328
      %v1330 = vpop.f32.mrb[0].mxu0
      %v1331 = vpop.f32.mrb[0].mxu0
      %v1332 = vadd.f32 %v1116, %v1331
      %v1333 = vpop.f32.mrb[0].mxu0
      %1334 = vmatprep.mubr.bf16.mxu0 0
      %1335 = vmatmul.mubr.bf16.gmra.mrb[0].mxu0 %v1092
      %v1336 = vpop.f32.mrb[0].mxu0
      %v1337 = vadd.f32 %v1116, %v1336
      %v1338 = vpop.f32.mrb[0].mxu0
      %v1339 = vpop.f32.mrb[0].mxu0
      %v1340 = vadd.f32 %v1116, %v1339
      %v1341 = vpop.f32.mrb[0].mxu0
      %1342 = vmatprep.mubr.bf16.mxu0 0
      %1343 = vmatmul.mubr.bf16.gmra.mrb[0].mxu0 %v1093
      %v1344 = vpop.f32.mrb[0].mxu0
      %v1345 = vadd.f32 %v1116, %v1344
      %v1346 = vpop.f32.mrb[0].mxu0
      %v1347 = vpop.f32.mrb[0].mxu0
      %v1348 = vadd.f32 %v1116, %v1347
      %v1349 = vpop.f32.mrb[0].mxu0
      %1350 = vmatprep.mubr.bf16.mxu0 0
      %1351 = vmatmul.mubr.bf16.gmra.mrb[0].mxu0 %v1094
      %v1352 = vpop.f32.mrb[0].mxu0
      %v1353 = vadd.f32 %v1116, %v1352
      %v1354 = vpop.f32.mrb[0].mxu0
      %v1355 = vpop.f32.mrb[0].mxu0
      %v1356 = vadd.f32 %v1116, %v1355
      %v1357 = vpop.f32.mrb[0].mxu0
      %1358 = vdwg.mxu0
      %v1359 = vmax.f32 %v1201, 0.0
      %v1360 = vmax.f32 %v1204, 0.0
      %v1361 = vmax.f32 %v1209, 0.0
      %v1362 = vmax.f32 %v1212, 0.0
      %v1363 = vmax.f32 %v1217, 0.0
      %v1364 = vmax.f32 %v1220, 0.0
      %v1365 = vmax.f32 %v1225, 0.0
      %v1366 = vmax.f32 %v1228, 0.0
      %v1367 = vmax.f32 %v1233, 0.0
      %v1368 = vmax.f32 %v1236, 0.0
      %v1369 = vmax.f32 %v1241, 0.0
      %v1370 = vmax.f32 %v1244, 0.0
      %v1371 = vmax.f32 %v1249, 0.0
      %v1372 = vmax.f32 %v1252, 0.0
      %v1373 = vmax.f32 %v1257, 0.0
      %v1374 = vmax.f32 %v1260, 0.0
      %v1375 = vmax.f32 %v1265, 0.0
      %v1376 = vmax.f32 %v1268, 0.0
      %v1377 = vmax.f32 %v1273, 0.0
      %v1378 = vmax.f32 %v1276, 0.0
      %v1379 = vmax.f32 %v1281, 0.0
      %v1380 = vmax.f32 %v1284, 0.0
      %v1381 = vmax.f32 %v1289, 0.0
      %v1382 = vmax.f32 %v1292, 0.0
      %v1383 = vmax.f32 %v1297, 0.0
      %v1384 = vmax.f32 %v1300, 0.0
      %v1385 = vmax.f32 %v1305, 0.0
      %v1386 = vmax.f32 %v1308, 0.0
      %v1387 = vmax.f32 %v1313, 0.0
      %v1388 = vmax.f32 %v1316, 0.0
      %v1389 = vmax.f32 %v1321, 0.0
      %v1390 = vmax.f32 %v1324, 0.0
      %v1391 = vmax.f32 %v1329, 0.0
      %v1392 = vmax.f32 %v1332, 0.0
      %v1393 = vmax.f32 %v1337, 0.0
      %v1394 = vmax.f32 %v1340, 0.0
      %v1395 = vmax.f32 %v1345, 0.0
      %v1396 = vmax.f32 %v1348, 0.0
      %v1397 = vmax.f32 %v1353, 0.0
      %v1398 = vmax.f32 %v1356, 0.0
      %v1399 = vpack.c.bf16 %v1360, %v1359
      %v1400 = vpack.c.bf16 %v1362, %v1361
      %v1401 = vpack.c.bf16 %v1364, %v1363
      %v1402 = vpack.c.bf16 %v1366, %v1365
      %v1403 = vpack.c.bf16 %v1368, %v1367
      %v1404 = vpack.c.bf16 %v1370, %v1369
      %v1405 = vpack.c.bf16 %v1372, %v1371
      %v1406 = vpack.c.bf16 %v1374, %v1373
      %v1407 = vpack.c.bf16 %v1376, %v1375
      %v1408 = vpack.c.bf16 %v1378, %v1377
      %v1409 = vpack.c.bf16 %v1380, %v1379
      %v1410 = vpack.c.bf16 %v1382, %v1381
      %v1411 = vpack.c.bf16 %v1384, %v1383
      %v1412 = vpack.c.bf16 %v1386, %v1385
      %v1413 = vpack.c.bf16 %v1388, %v1387
      %v1414 = vpack.c.bf16 %v1390, %v1389
      %v1415 = vpack.c.bf16 %v1392, %v1391
      %v1416 = vpack.c.bf16 %v1394, %v1393
      %v1417 = vpack.c.bf16 %v1396, %v1395
      %v1418 = vpack.c.bf16 %v1398, %v1397
      %v1419 = vld [vmem:[%s7] sm:$0xf]
      %v1420 = vld [vmem:[%s7 + $0x4] sm:$0xf]
      %v1421 = vld [vmem:[%s7 + $0x8] sm:$0xf]
      %v1422 = vld [vmem:[%s7 + $0xc] sm:$0xf]
      %v1423 = vld [vmem:[%s7 + $0x10] sm:$0xf]
      %v1424 = vld [vmem:[%s7 + $0x14] sm:$0xf]
      %v1425 = vld [vmem:[%s7 + $0x18] sm:$0xf]
      %v1426 = vld [vmem:[%s7 + $0x1c] sm:$0xf]
      %v1427 = vld [vmem:[%s7 + $0x20] sm:$0xf]
      %v1428 = vld [vmem:[%s7 + $0x24] sm:$0xf]
      %v1429 = vld [vmem:[%s7 + $0x28] sm:$0xf]
      %v1430 = vld [vmem:[%s7 + $0x2c] sm:$0xf]
      %v1431 = vld [vmem:[%s7 + $0x30] sm:$0xf]
      %v1432 = vld [vmem:[%s7 + $0x34] sm:$0xf]
      %v1433 = vld [vmem:[%s7 + $0x38] sm:$0xf]
      %v1434 = vld [vmem:[%s7 + $0x3c] sm:$0xf]
      %s1435 = sld [smem:[#allocation2]]
      %v1436 = vstv %s1435
      %v1453 = vunpack.c.l.b16 %v1419
      %v1454 = vunpack.c.l.b16 %v1420
      %v1455 = vunpack.c.l.b16 %v1421
      %v1456 = vunpack.c.l.b16 %v1422
      %v1457 = vunpack.c.l.b16 %v1423
      %v1458 = vunpack.c.l.b16 %v1424
      %v1459 = vunpack.c.l.b16 %v1425
      %v1460 = vunpack.c.l.b16 %v1426
      %v1461 = vunpack.c.l.b16 %v1427
      %v1462 = vunpack.c.l.b16 %v1428
      %v1463 = vunpack.c.l.b16 %v1429
      %v1464 = vunpack.c.l.b16 %v1430
      %v1465 = vunpack.c.l.b16 %v1431
      %v1466 = vunpack.c.l.b16 %v1432
      %v1467 = vunpack.c.l.b16 %v1433
      %v1468 = vunpack.c.l.b16 %v1434
      %v1469 = vpack.c.b16 %v1454, %v1453
      %v1470 = vpack.c.b16 %v1456, %v1455
      %v1471 = vpack.c.b16 %v1458, %v1457
      %v1472 = vpack.c.b16 %v1460, %v1459
      %v1473 = vpack.c.b16 %v1462, %v1461
      %v1474 = vpack.c.b16 %v1464, %v1463
      %v1475 = vpack.c.b16 %v1466, %v1465
      %v1476 = vpack.c.b16 %v1468, %v1467
      %1485 = vmatprep.subr.bf16.mxu0 0
      %1486 = vmatpush1.bf16.msra.mxu0 %v1469
      %1487 = vmatprep.subr.bf16.mxu0 0
      %1488 = vmatpush1.bf16.msra.mxu0 %v1470
      %1489 = vmatprep.subr.bf16.mxu0 0
      %1490 = vmatpush1.bf16.msra.mxu0 %v1471
      %1491 = vmatprep.subr.bf16.mxu0 0
      %1492 = vmatpush1.bf16.msra.mxu0 %v1472
      %1493 = vmatprep.subr.bf16.mxu0 0
      %1494 = vmatpush1.bf16.msra.mxu0 %v1473
      %1495 = vmatprep.subr.bf16.mxu0 0
      %1496 = vmatpush1.bf16.msra.mxu0 %v1474
      %1497 = vmatprep.subr.bf16.mxu0 0
      %1498 = vmatpush1.bf16.msra.mxu0 %v1475
      %1499 = vmatprep.subr.bf16.mxu0 0
      %1500 = vmatpush1.bf16.msra.mxu0 %v1476
      %1501 = vmatprep.subr.bf16.mxu0 0
      %1502 = vmatpush1.bf16.msra.mxu0 0
      %1503 = vmatprep.subr.bf16.mxu0 0
      %1504 = vmatpush1.bf16.msra.mxu0 0
      %1505 = vmatprep.subr.bf16.mxu0 0
      %1506 = vmatpush1.bf16.msra.mxu0 0
      %1507 = vmatprep.subr.bf16.mxu0 0
      %1508 = vmatpush1.bf16.msra.mxu0 0
      %1509 = vmatprep.subr.bf16.mxu0 0
      %1510 = vmatpush1.bf16.msra.mxu0 0
      %1511 = vmatprep.subr.bf16.mxu0 0
      %1512 = vmatpush1.bf16.msra.mxu0 0
      %1513 = vmatprep.subr.bf16.mxu0 0
      %1514 = vmatpush1.bf16.msra.mxu0 0
      %1515 = vmatprep.subr.bf16.mxu0 0
      %1516 = vmatpush1.bf16.msra.mxu0 0
      %1517 = vmatprep.mubr.bf16.mxu0 0
      %1518 = vmatmul.mubr.bf16.gmra.mrb[0].mxu0 %v1399
      %v1519 = vpop.f32.mrb[0].mxu0
      %v1520 = vadd.f32 %v1436, %v1519
      %v1521 = vpop.f32.mrb[0].mxu0
      %v1522 = vpop.f32.mrb[0].mxu0
      %v1523 = vadd.f32 %v1436, %v1522
      %v1524 = vpop.f32.mrb[0].mxu0
      %1525 = vmatprep.mubr.bf16.mxu0 0
      %1526 = vmatmul.mubr.bf16.gmra.mrb[0].mxu0 %v1400
      %v1527 = vpop.f32.mrb[0].mxu0
      %v1528 = vadd.f32 %v1436, %v1527
      %v1529 = vpop.f32.mrb[0].mxu0
      %v1530 = vpop.f32.mrb[0].mxu0
      %v1531 = vadd.f32 %v1436, %v1530
      %v1532 = vpop.f32.mrb[0].mxu0
      %1533 = vmatprep.mubr.bf16.mxu0 0
      %1534 = vmatmul.mubr.bf16.gmra.mrb[0].mxu0 %v1401
      %v1535 = vpop.f32.mrb[0].mxu0
      %v1536 = vadd.f32 %v1436, %v1535
      %v1537 = vpop.f32.mrb[0].mxu0
      %v1538 = vpop.f32.mrb[0].mxu0
      %v1539 = vadd.f32 %v1436, %v1538
      %v1540 = vpop.f32.mrb[0].mxu0
      %1541 = vmatprep.mubr.bf16.mxu0 0
      %1542 = vmatmul.mubr.bf16.gmra.mrb[0].mxu0 %v1402
      %v1543 = vpop.f32.mrb[0].mxu0
      %v1544 = vadd.f32 %v1436, %v1543
      %v1545 = vpop.f32.mrb[0].mxu0
      %v1546 = vpop.f32.mrb[0].mxu0
      %v1547 = vadd.f32 %v1436, %v1546
      %v1548 = vpop.f32.mrb[0].mxu0
      %1549 = vmatprep.mubr.bf16.mxu0 0
      %1550 = vmatmul.mubr.bf16.gmra.mrb[0].mxu0 %v1403
      %v1551 = vpop.f32.mrb[0].mxu0
      %v1552 = vadd.f32 %v1436, %v1551
      %v1553 = vpop.f32.mrb[0].mxu0
      %v1554 = vpop.f32.mrb[0].mxu0
      %v1555 = vadd.f32 %v1436, %v1554
      %v1556 = vpop.f32.mrb[0].mxu0
      %1557 = vmatprep.mubr.bf16.mxu0 0
      %1558 = vmatmul.mubr.bf16.gmra.mrb[0].mxu0 %v1404
      %v1559 = vpop.f32.mrb[0].mxu0
      %v1560 = vadd.f32 %v1436, %v1559
      %v1561 = vpop.f32.mrb[0].mxu0
      %v1562 = vpop.f32.mrb[0].mxu0
      %v1563 = vadd.f32 %v1436, %v1562
      %v1564 = vpop.f32.mrb[0].mxu0
      %1565 = vmatprep.mubr.bf16.mxu0 0
      %1566 = vmatmul.mubr.bf16.gmra.mrb[0].mxu0 %v1405
      %v1567 = vpop.f32.mrb[0].mxu0
      %v1568 = vadd.f32 %v1436, %v1567
      %v1569 = vpop.f32.mrb[0].mxu0
      %v1570 = vpop.f32.mrb[0].mxu0
      %v1571 = vadd.f32 %v1436, %v1570
      %v1572 = vpop.f32.mrb[0].mxu0
      %1573 = vmatprep.mubr.bf16.mxu0 0
      %1574 = vmatmul.mubr.bf16.gmra.mrb[0].mxu0 %v1406
      %v1575 = vpop.f32.mrb[0].mxu0
      %v1576 = vadd.f32 %v1436, %v1575
      %v1577 = vpop.f32.mrb[0].mxu0
      %v1578 = vpop.f32.mrb[0].mxu0
      %v1579 = vadd.f32 %v1436, %v1578
      %v1580 = vpop.f32.mrb[0].mxu0
      %1581 = vmatprep.mubr.bf16.mxu0 0
      %1582 = vmatmul.mubr.bf16.gmra.mrb[0].mxu0 %v1407
      %v1583 = vpop.f32.mrb[0].mxu0
      %v1584 = vadd.f32 %v1436, %v1583
      %v1585 = vpop.f32.mrb[0].mxu0
      %v1586 = vpop.f32.mrb[0].mxu0
      %v1587 = vadd.f32 %v1436, %v1586
      %v1588 = vpop.f32.mrb[0].mxu0
      %1589 = vmatprep.mubr.bf16.mxu0 0
      %1590 = vmatmul.mubr.bf16.gmra.mrb[0].mxu0 %v1408
      %v1591 = vpop.f32.mrb[0].mxu0
      %v1592 = vadd.f32 %v1436, %v1591
      %v1593 = vpop.f32.mrb[0].mxu0
      %v1594 = vpop.f32.mrb[0].mxu0
      %v1595 = vadd.f32 %v1436, %v1594
      %v1596 = vpop.f32.mrb[0].mxu0
      %1597 = vmatprep.mubr.bf16.mxu0 0
      %1598 = vmatmul.mubr.bf16.gmra.mrb[0].mxu0 %v1409
      %v1599 = vpop.f32.mrb[0].mxu0
      %v1600 = vadd.f32 %v1436, %v1599
      %v1601 = vpop.f32.mrb[0].mxu0
      %v1602 = vpop.f32.mrb[0].mxu0
      %v1603 = vadd.f32 %v1436, %v1602
      %v1604 = vpop.f32.mrb[0].mxu0
      %1605 = vmatprep.mubr.bf16.mxu0 0
      %1606 = vmatmul.mubr.bf16.gmra.mrb[0].mxu0 %v1410
      %v1607 = vpop.f32.mrb[0].mxu0
      %v1608 = vadd.f32 %v1436, %v1607
      %v1609 = vpop.f32.mrb[0].mxu0
      %v1610 = vpop.f32.mrb[0].mxu0
      %v1611 = vadd.f32 %v1436, %v1610
      %v1612 = vpop.f32.mrb[0].mxu0
      %1613 = vmatprep.mubr.bf16.mxu0 0
      %1614 = vmatmul.mubr.bf16.gmra.mrb[0].mxu0 %v1411
      %v1615 = vpop.f32.mrb[0].mxu0
      %v1616 = vadd.f32 %v1436, %v1615
      %v1617 = vpop.f32.mrb[0].mxu0
      %v1618 = vpop.f32.mrb[0].mxu0
      %v1619 = vadd.f32 %v1436, %v1618
      %v1620 = vpop.f32.mrb[0].mxu0
      %1621 = vmatprep.mubr.bf16.mxu0 0
      %1622 = vmatmul.mubr.bf16.gmra.mrb[0].mxu0 %v1412
      %v1623 = vpop.f32.mrb[0].mxu0
      %v1624 = vadd.f32 %v1436, %v1623
      %v1625 = vpop.f32.mrb[0].mxu0
      %v1626 = vpop.f32.mrb[0].mxu0
      %v1627 = vadd.f32 %v1436, %v1626
      %v1628 = vpop.f32.mrb[0].mxu0
      %1629 = vmatprep.mubr.bf16.mxu0 0
      %1630 = vmatmul.mubr.bf16.gmra.mrb[0].mxu0 %v1413
      %v1631 = vpop.f32.mrb[0].mxu0
      %v1632 = vadd.f32 %v1436, %v1631
      %v1633 = vpop.f32.mrb[0].mxu0
      %v1634 = vpop.f32.mrb[0].mxu0
      %v1635 = vadd.f32 %v1436, %v1634
      %v1636 = vpop.f32.mrb[0].mxu0
      %1637 = vmatprep.mubr.bf16.mxu0 0
      %1638 = vmatmul.mubr.bf16.gmra.mrb[0].mxu0 %v1414
      %v1639 = vpop.f32.mrb[0].mxu0
      %v1640 = vadd.f32 %v1436, %v1639
      %v1641 = vpop.f32.mrb[0].mxu0
      %v1642 = vpop.f32.mrb[0].mxu0
      %v1643 = vadd.f32 %v1436, %v1642
      %v1644 = vpop.f32.mrb[0].mxu0
      %1645 = vmatprep.mubr.bf16.mxu0 0
      %1646 = vmatmul.mubr.bf16.gmra.mrb[0].mxu0 %v1415
      %v1647 = vpop.f32.mrb[0].mxu0
      %v1648 = vadd.f32 %v1436, %v1647
      %v1649 = vpop.f32.mrb[0].mxu0
      %v1650 = vpop.f32.mrb[0].mxu0
      %v1651 = vadd.f32 %v1436, %v1650
      %v1652 = vpop.f32.mrb[0].mxu0
      %1653 = vmatprep.mubr.bf16.mxu0 0
      %1654 = vmatmul.mubr.bf16.gmra.mrb[0].mxu0 %v1416
      %v1655 = vpop.f32.mrb[0].mxu0
      %v1656 = vadd.f32 %v1436, %v1655
      %v1657 = vpop.f32.mrb[0].mxu0
      %v1658 = vpop.f32.mrb[0].mxu0
      %v1659 = vadd.f32 %v1436, %v1658
      %v1660 = vpop.f32.mrb[0].mxu0
      %1661 = vmatprep.mubr.bf16.mxu0 0
      %1662 = vmatmul.mubr.bf16.gmra.mrb[0].mxu0 %v1417
      %v1663 = vpop.f32.mrb[0].mxu0
      %v1664 = vadd.f32 %v1436, %v1663
      %v1665 = vpop.f32.mrb[0].mxu0
      %v1666 = vpop.f32.mrb[0].mxu0
      %v1667 = vadd.f32 %v1436, %v1666
      %v1668 = vpop.f32.mrb[0].mxu0
      %1669 = vmatprep.mubr.bf16.mxu0 0
      %1670 = vmatmul.mubr.bf16.gmra.mrb[0].mxu0 %v1418
      %v1671 = vpop.f32.mrb[0].mxu0
      %v1672 = vadd.f32 %v1436, %v1671
      %v1673 = vpop.f32.mrb[0].mxu0
      %v1674 = vpop.f32.mrb[0].mxu0
      %v1675 = vadd.f32 %v1436, %v1674
      %v1676 = vpop.f32.mrb[0].mxu0
      %1677 = vdwg.mxu0
      %vm1678 = vcmask 31744
      %1679 = vst.msk [vmem:[%s355] sm:$0xff] %vm1678, %v1520
      %1680 = vst.msk [vmem:[%s355 + $0x8] sm:$0xff] %vm1678, %v1523
      %1681 = vst.msk [vmem:[%s355 + $0x10] sm:$0xff] %vm1678, %v1528
      %1682 = vst.msk [vmem:[%s355 + $0x18] sm:$0xff] %vm1678, %v1531
      %1683 = vst.msk [vmem:[%s355 + $0x20] sm:$0xff] %vm1678, %v1536
      %1684 = vst.msk [vmem:[%s355 + $0x28] sm:$0xff] %vm1678, %v1539
      %1685 = vst.msk [vmem:[%s355 + $0x30] sm:$0xff] %vm1678, %v1544
      %1686 = vst.msk [vmem:[%s355 + $0x38] sm:$0xff] %vm1678, %v1547
      %1687 = vst.msk [vmem:[%s355 + $0x40] sm:$0xff] %vm1678, %v1552
      %1688 = vst.msk [vmem:[%s355 + $0x48] sm:$0xff] %vm1678, %v1555
      %1689 = vst.msk [vmem:[%s355 + $0x50] sm:$0xff] %vm1678, %v1560
      %1690 = vst.msk [vmem:[%s355 + $0x58] sm:$0xff] %vm1678, %v1563
      %1691 = vst.msk [vmem:[%s355 + $0x60] sm:$0xff] %vm1678, %v1568
      %1692 = vst.msk [vmem:[%s355 + $0x68] sm:$0xff] %vm1678, %v1571
      %1693 = vst.msk [vmem:[%s355 + $0x70] sm:$0xff] %vm1678, %v1576
      %1694 = vst.msk [vmem:[%s355 + $0x78] sm:$0xff] %vm1678, %v1579
      %1695 = vst.msk [vmem:[%s355 + $0x80] sm:$0xff] %vm1678, %v1584
      %1696 = vst.msk [vmem:[%s355 + $0x88] sm:$0xff] %vm1678, %v1587
      %1697 = vst.msk [vmem:[%s355 + $0x90] sm:$0xff] %vm1678, %v1592
      %1698 = vst.msk [vmem:[%s355 + $0x98] sm:$0xff] %vm1678, %v1595
      %1699 = vst.msk [vmem:[%s355 + $0xa0] sm:$0xff] %vm1678, %v1600
      %1700 = vst.msk [vmem:[%s355 + $0xa8] sm:$0xff] %vm1678, %v1603
      %1701 = vst.msk [vmem:[%s355 + $0xb0] sm:$0xff] %vm1678, %v1608
      %1702 = vst.msk [vmem:[%s355 + $0xb8] sm:$0xff] %vm1678, %v1611
      %1703 = vst.msk [vmem:[%s355 + $0xc0] sm:$0xff] %vm1678, %v1616
      %1704 = vst.msk [vmem:[%s355 + $0xc8] sm:$0xff] %vm1678, %v1619
      %1705 = vst.msk [vmem:[%s355 + $0xd0] sm:$0xff] %vm1678, %v1624
      %1706 = vst.msk [vmem:[%s355 + $0xd8] sm:$0xff] %vm1678, %v1627
      %1707 = vst.msk [vmem:[%s355 + $0xe0] sm:$0xff] %vm1678, %v1632
      %1708 = vst.msk [vmem:[%s355 + $0xe8] sm:$0xff] %vm1678, %v1635
      %1709 = vst.msk [vmem:[%s355 + $0xf0] sm:$0xff] %vm1678, %v1640
      %1710 = vst.msk [vmem:[%s355 + $0xf8] sm:$0xff] %vm1678, %v1643
      %1711 = vst.msk [vmem:[%s355 + $0x100] sm:$0xff] %vm1678, %v1648
      %1712 = vst.msk [vmem:[%s355 + $0x108] sm:$0xff] %vm1678, %v1651
      %1713 = vst.msk [vmem:[%s355 + $0x110] sm:$0xff] %vm1678, %v1656
      %1714 = vst.msk [vmem:[%s355 + $0x118] sm:$0xff] %vm1678, %v1659
      %1715 = vst.msk [vmem:[%s355 + $0x120] sm:$0xff] %vm1678, %v1664
      %1716 = vst.msk [vmem:[%s355 + $0x128] sm:$0xff] %vm1678, %v1667
      %1717 = vst.msk [vmem:[%s355 + $0x130] sm:$0xff] %vm1678, %v1672
      %1718 = vst.msk [vmem:[%s355 + $0x138] sm:$0xff] %vm1678, %v1675
      %s1719 = smul.u32 40, %s21
      %p1720 = scmp.lt.s32.totalorder %s1719, 79
      %s1721 = scalar_select %p1720, %s1719, 79
      %s1722 = smul.addr %s1721, 8
      %s1723 = scalar_lea.vmem %s9, %s1722
      // Predicated region
      $region57: #{critic_v2_forward.1} parent=55 // pred_check
        %p1724 = pneg %p233
      $region58: #{critic_v2_forward.1} parent=55 // pred_check_branch
        %1726 = sbr.rel (%p1724) target = $region60
      $region59: #{critic_v2_forward.1} parent=55 // pred_region
        %s1727 = smul.u32 40, %s21
      $region60: #{critic_v2_forward.1} parent=55 // pred_fallthru
        _
    $region56: #{critic_v2_forward.1} parent=5 // pred_fallthru
      _
    %p1728 = scmp.le.s32.totalorder 2, %s16
    // Predicated region
    $region61: #{critic_v2_forward.1} parent=5 // pred_check
      %p1729 = pneg %p1728
    $region62: #{critic_v2_forward.1} parent=5 // pred_check_branch
      %1731 = sbr.rel (%p1729) target = $region64
    $region63: #{critic_v2_forward.1} parent=5 // pred_region
      %s1732 = ssub.s32 %s16, 2
      // Predicated region
      $region65: #{critic_v2_forward.1} parent=63 // pred_check
        %p1733 = pneg %p239
      $region66: #{critic_v2_forward.1} parent=63 // pred_check_branch
        %1735 = sbr.rel (%p1733) target = $region68
      $region67: #{critic_v2_forward.1} parent=63 // pred_region
        %s1736 = smul.u32 40, %s22
        %p1737 = scmp.lt.s32.totalorder %s1736, 79
        %s1738 = scalar_select %p1737, %s1736, 79
        %s1739 = smul.addr %s1738, 8
        %s1740 = scalar_lea.vmem %s9, %s1739
      $region68: #{critic_v2_forward.1} parent=63 // pred_fallthru
        _
    $region64: #{critic_v2_forward.1} parent=5 // pred_fallthru
      _
  $region6: #{critic_v2_forward.1} parent=0 // loop_footer
    %s20 = sadd.s32 1, %s16
  $region7: #{critic_v2_forward.1} parent=0 // loop_footer_branch
    %15 = sbr.rel target = $region3
  $region8: #{critic_v2_forward.1} parent=0 // loop_exit
    _

</llo_original>
